<compile_context>
chip_gen: v7x
topology: tpu7x:2x2x1
jax: 0.10.0
libtpu: 0.0.40
codegen_flags: <defaults>
</compile_context>

<pallas_src>
import jax
import jax.numpy as jnp
from jax.experimental import pallas as pl
from jax.experimental.pallas import tpu as pltpu

D_MODEL = 32
NUM_HEADS = 4
D_FF = 64
D_HEAD = D_MODEL // NUM_HEADS
EPS = 1e-5  # torch.nn.LayerNorm default


def _layer_norm(x, gamma, beta):
    mean = jnp.mean(x, axis=-1, keepdims=True)
    var = jnp.mean(jnp.square(x - mean), axis=-1, keepdims=True)
    return (x - mean) * jax.lax.rsqrt(var + EPS) * gamma + beta


def encoder_layer(x, src_mask, params, *, return_attn=True):
    """x: (B, T, D_MODEL) f32, src_mask: (B, T, T) bool (True == masked)."""
    B, T, D = x.shape
    H, DH = NUM_HEADS, D_HEAD
    BB = pl.cdiv(B, 2)            # batch elements per grid step -> 2 steps for megacore
    GRID = pl.cdiv(B, BB)
    ROWS = BB * T                 # rows per grid step for LN / projections / FFN
    scale = 1.0 / float(DH) ** 0.5

    # Lane-dense packing of the attention output (single unmasked store).
    LANE_DENSE_ATTN = (H * T * T) % 128 == 0
    SUB = (H * T * T) // 128 if LANE_DENSE_ATTN else 0

    # ---- host-side layout plumbing / packing ----
    x_flat = x.reshape(B * T, D)                                                  # rows pre-flattened
    wqkv = jnp.concatenate([params["wq"], params["wk"], params["wv"]], axis=1)    # (D, 3D)
    bqkv = jnp.concatenate([params["bq"], params["bk"], params["bv"]], axis=1)    # (1, 3D)
    ln_p = jnp.concatenate([params["g1"], params["be1"],
                            params["g2"], params["be2"]], axis=0)                 # (4, D)
    # Additive attention bias: 0 for keep, -inf for masked (matches masked_fill(-inf)).
    mask_bias = jnp.where(src_mask, -jnp.inf, 0.0).astype(jnp.float32)            # (B, T, T)

    def kernel(x_ref, bias_ref, ln_ref, wqkv_ref, bqkv_ref,
               w1_ref, b1_ref, w2_ref, b2_ref, out_ref, *attn_refs):
        x2 = x_ref[...]                                   # (ROWS, D), no in-kernel reshape
        lnp = ln_ref[...]
        g1, be1, g2, be2 = lnp[0:1], lnp[1:2], lnp[2:3], lnp[3:4]
        bias = bias_ref[...]                              # (BB, T, T) additive 0 / -inf

        # ---- attention pre-norm + fused QKV projection (one MXU sequence) ----
        xn = _layer_norm(x2, g1, be1)
        qkv = jnp.dot(xn, wqkv_ref[...],
                      preferred_element_type=jnp.float32) + bqkv_ref[...]         # (ROWS, 3D)

        # ---- per-head attention: static lane slices, no transposes ----
        ctx_heads = []
        attn_heads = []
        for h in range(H):                                # H=4, fully unrolled
            q_h = qkv[:, h * DH:(h + 1) * DH].reshape(BB, T, DH)
            k_h = qkv[:, D + h * DH: D + (h + 1) * DH].reshape(BB, T, DH)
            v_h = qkv[:, 2 * D + h * DH: 2 * D + (h + 1) * DH].reshape(BB, T, DH)

            s_h = jnp.einsum("btd,bsd->bts", q_h, k_h,
                             preferred_element_type=jnp.float32) * scale + bias   # (BB, T, T)
            # NOTE: a fully-masked row yields NaN (inf - inf), matching
            # torch masked_fill(-inf) + softmax behavior.
            s_h = s_h - jnp.max(s_h, axis=-1, keepdims=True)
            e = jnp.exp(s_h)
            a_h = e / jnp.sum(e, axis=-1, keepdims=True)  # exact div (1e-5 attn tolerance)
            attn_heads.append(a_h)

            c_h = jnp.einsum("bts,bsd->btd", a_h, v_h,
                             preferred_element_type=jnp.float32)                  # (BB, T, DH)
            ctx_heads.append(c_h.reshape(ROWS, DH))

        ctx = jnp.concatenate(ctx_heads, axis=-1)         # (ROWS, D) static lane concat
        hidden = ctx + x2                                 # residual 1

        # ---- feed-forward pre-norm + FFN ----
        hn = _layer_norm(hidden, g2, be2)
        ff = jnp.dot(hn, w1_ref[...], preferred_element_type=jnp.float32) + b1_ref[...]
        ff = jnp.maximum(ff, 0.0)                         # ReLU
        # TODO(synk): dropout inside MultiHeadAttention / PositionwiseFeedForward omitted
        # (identity in eval mode).
        ff = jnp.dot(ff, w2_ref[...], preferred_element_type=jnp.float32) + b2_ref[...]

        out_ref[...] = ff + hidden                        # residual 2, (ROWS, D)

        if return_attn:
            attn_ref = attn_refs[0]
            if LANE_DENSE_ATTN:
                attn_flat = jnp.concatenate([a.reshape(BB, T * T) for a in attn_heads],
                                            axis=-1)      # (BB, H*T*T)
                attn_ref[...] = attn_flat.reshape(BB, SUB, 128)   # lane-dense store
            else:
                attn_ref[...] = jnp.stack(attn_heads, axis=1)     # (BB, H, T, T)

    def const(shape):
        return pl.BlockSpec(shape, lambda b: (0,) * len(shape))

    in_specs = [
        pl.BlockSpec((ROWS, D), lambda b: (b, 0)),        # x rows for this batch block
        pl.BlockSpec((BB, T, T), lambda b: (b, 0, 0)),    # additive mask bias
        const((4, D)),                                    # packed LN gamma/beta
        const((D, 3 * D)), const((1, 3 * D)),             # fused QKV weight / bias
        const((D, D_FF)), const((1, D_FF)),               # FFN W1 / b1
        const((D_FF, D)), const((1, D)),                  # FFN W2 / b2
    ]

    out_shapes = [jax.ShapeDtypeStruct((B * T, D), jnp.float32)]
    out_specs = [pl.BlockSpec((ROWS, D), lambda b: (b, 0))]
    if return_attn:
        if LANE_DENSE_ATTN:
            out_shapes.append(jax.ShapeDtypeStruct((B, SUB, 128), jnp.float32))
            out_specs.append(pl.BlockSpec((BB, SUB, 128), lambda b: (b, 0, 0)))
        else:
            out_shapes.append(jax.ShapeDtypeStruct((B, H, T, T), jnp.float32))
            out_specs.append(pl.BlockSpec((BB, H, T, T), lambda b: (b, 0, 0, 0)))

    # Advisory cost estimate so XLA schedules surrounding ops sensibly.
    flops = (2 * B * T * D * 3 * D                        # QKV projection
             + 2 * 2 * B * H * T * T * DH                 # QK^T and P@V
             + 2 * B * T * (D * D_FF + D_FF * D))         # FFN
    n_param = 4 * D + D * 3 * D + 3 * D + D * D_FF + D_FF + D_FF * D + D
    bytes_accessed = 4 * (B * T * D + B * T * T + n_param + B * T * D
                          + (B * H * T * T if return_attn else 0))
    cost = pl.CostEstimate(flops=flops, transcendentals=B * H * T * T,
                           bytes_accessed=bytes_accessed)

    outs = pl.pallas_call(
        kernel,
        out_shape=tuple(out_shapes),
        grid_spec=pltpu.PrefetchScalarGridSpec(
            num_scalar_prefetch=0,
            grid=(GRID,),
            in_specs=in_specs,
            out_specs=tuple(out_specs),
        ),
        compiler_params=pltpu.CompilerParams(
            dimension_semantics=("parallel",),            # shards batch blocks across TCs
            vmem_limit_bytes=32 * 1024 * 1024,            # safe on v5e/v6e (128 MiB) and v7x (64 MiB)
        ),
        cost_estimate=cost,
    )(x_flat, mask_bias, ln_p, wqkv, bqkv,
      params["w1"], params["b1"], params["w2"], params["b2"])

    out = outs[0].reshape(B, T, D)
    if not return_attn:
        return out, None
    # attn returned batched-head-major (B * num_heads, T, T), matching the
    # reference MultiHeadAttention convention.
    attn = outs[1].reshape(B, H, T, T).reshape(B * H, T, T)
    return out, attn


def reference(x, src_mask, p):
    """Pure-JAX reference matching the PyTorch forward pass (eval mode)."""
    def ln(x, g, b):
        m = x.mean(-1, keepdims=True)
        v = ((x - m) ** 2).mean(-1, keepdims=True)
        return (x - m) / jnp.sqrt(v + EPS) * g + b

    B, T, D = x.shape
    xn = ln(x, p["g1"][0], p["be1"][0])
    q = (xn @ p["wq"] + p["bq"][0]).reshape(B, T, NUM_HEADS, D_HEAD).transpose(0, 2, 1, 3)
    k = (xn @ p["wk"] + p["bk"][0]).reshape(B, T, NUM_HEADS, D_HEAD).transpose(0, 2, 1, 3)
    v = (xn @ p["wv"] + p["bv"][0]).reshape(B, T, NUM_HEADS, D_HEAD).transpose(0, 2, 1, 3)
    scores = jnp.einsum("bhqd,bhkd->bhqk", q, k) / jnp.sqrt(jnp.float32(D_HEAD))
    scores = jnp.where(src_mask[:, None, :, :], -jnp.inf, scores)
    attn = jax.nn.softmax(scores, axis=-1)
    ctx = jnp.einsum("bhqk,bhkd->bhqd", attn, v).transpose(0, 2, 1, 3).reshape(B, T, D)
    h = ctx + x
    hn = ln(h, p["g2"][0], p["be2"][0])
    ff = jnp.maximum(hn @ p["w1"] + p["b1"][0], 0.0) @ p["w2"] + p["b2"][0]
    return ff + h, attn.reshape(B * NUM_HEADS, T, T)


if __name__ == "__main__":
    B, T = 2, 8
    key = jax.random.PRNGKey(0)
    keys = jax.random.split(key, 12)

    x = jax.random.normal(keys[0], (B, T, D_MODEL), jnp.float32)
    # src_mask: True == masked.  Mask the last two key positions of batch 1.
    src_mask = jnp.zeros((B, T, T), dtype=bool).at[1, :, T - 2:].set(True)

    def init(k, shape, scale=0.05):
        return scale * jax.random.normal(k, shape, jnp.float32)

    params = {
        "g1": jnp.ones((1, D_MODEL), jnp.float32),
        "be1": jnp.zeros((1, D_MODEL), jnp.float32),
        "wq": init(keys[1], (D_MODEL, D_MODEL)),
        "bq": init(keys[2], (1, D_MODEL)),
        "wk": init(keys[3], (D_MODEL, D_MODEL)),
        "bk": init(keys[4], (1, D_MODEL)),
        "wv": init(keys[5], (D_MODEL, D_MODEL)),
        "bv": init(keys[6], (1, D_MODEL)),
        "g2": jnp.ones((1, D_MODEL), jnp.float32),
        "be2": jnp.zeros((1, D_MODEL), jnp.float32),
        "w1": init(keys[7], (D_MODEL, D_FF)),
        "b1": init(keys[8], (1, D_FF)),
        "w2": init(keys[9], (D_FF, D_MODEL)),
        "b2": init(keys[10], (1, D_MODEL)),
    }

    out, attn = encoder_layer(x, src_mask, params)
    jax.block_until_ready((out, attn))

    ref_out, ref_attn = reference(x, src_mask, params)
    assert out.shape == (B, T, D_MODEL) and attn.shape == (B * NUM_HEADS, T, T)
    assert jnp.allclose(out, ref_out, atol=1e-4, rtol=1e-4), "output mismatch"
    assert jnp.allclose(attn, ref_attn, atol=1e-5, rtol=1e-5), "attention mismatch"

    print("KERNEL_OK")
</pallas_src>

<mosaic_0001>
module attributes {stable_mosaic.version = 11 : i64} {
  func.func @kernel(%arg0: i32, %arg1: memref<8x32xf32, #tpu.memory_space<vmem>>, %arg2: memref<1x8x8xf32, #tpu.memory_space<vmem>>, %arg3: memref<4x32xf32, #tpu.memory_space<vmem>>, %arg4: memref<32x96xf32, #tpu.memory_space<vmem>>, %arg5: memref<1x96xf32, #tpu.memory_space<vmem>>, %arg6: memref<32x64xf32, #tpu.memory_space<vmem>>, %arg7: memref<1x64xf32, #tpu.memory_space<vmem>>, %arg8: memref<64x32xf32, #tpu.memory_space<vmem>>, %arg9: memref<1x32xf32, #tpu.memory_space<vmem>>, %arg10: memref<8x32xf32, #tpu.memory_space<vmem>>, %arg11: memref<1x2x128xf32, #tpu.memory_space<vmem>>) attributes {dimension_semantics = [#tpu.dimension_semantics<parallel>], iteration_bounds = array<i64: 2>, scalar_prefetch = 0 : i64, scratch_operands = 0 : i64, tpu.core_type = #tpu.core_type<tc>, window_params = [{transform_indices = @transform_0, window_bounds = array<i64: 8, 32>}, {transform_indices = @transform_1, window_bounds = array<i64: 1, 8, 8>}, {pipeline_mode = #tpu.pipeline_mode<synchronous>, transform_indices = @transform_2, window_bounds = array<i64: 4, 32>}, {pipeline_mode = #tpu.pipeline_mode<synchronous>, transform_indices = @transform_3, window_bounds = array<i64: 32, 96>}, {pipeline_mode = #tpu.pipeline_mode<synchronous>, transform_indices = @transform_4, window_bounds = array<i64: 1, 96>}, {pipeline_mode = #tpu.pipeline_mode<synchronous>, transform_indices = @transform_5, window_bounds = array<i64: 32, 64>}, {pipeline_mode = #tpu.pipeline_mode<synchronous>, transform_indices = @transform_6, window_bounds = array<i64: 1, 64>}, {pipeline_mode = #tpu.pipeline_mode<synchronous>, transform_indices = @transform_7, window_bounds = array<i64: 64, 32>}, {pipeline_mode = #tpu.pipeline_mode<synchronous>, transform_indices = @transform_8, window_bounds = array<i64: 1, 32>}, {transform_indices = @transform_9, window_bounds = array<i64: 8, 32>}, {transform_indices = @transform_10, window_bounds = array<i64: 1, 2, 128>}]} {
    %c0 = arith.constant 0 : index
    %c0_0 = arith.constant 0 : index
    %0 = vector.load %arg1[%c0, %c0_0] : memref<8x32xf32, #tpu.memory_space<vmem>>, vector<8x32xf32>
    %c0_1 = arith.constant 0 : index
    %c0_2 = arith.constant 0 : index
    %1 = vector.load %arg3[%c0_1, %c0_2] : memref<4x32xf32, #tpu.memory_space<vmem>>, vector<4x32xf32>
    %2 = vector.extract_strided_slice %1 {offsets = [0, 0], sizes = [1, 32], strides = [1, 1]} : vector<4x32xf32> to vector<1x32xf32>
    %3 = vector.extract_strided_slice %1 {offsets = [1, 0], sizes = [1, 32], strides = [1, 1]} : vector<4x32xf32> to vector<1x32xf32>
    %4 = vector.extract_strided_slice %1 {offsets = [2, 0], sizes = [1, 32], strides = [1, 1]} : vector<4x32xf32> to vector<1x32xf32>
    %5 = vector.extract_strided_slice %1 {offsets = [3, 0], sizes = [1, 32], strides = [1, 1]} : vector<4x32xf32> to vector<1x32xf32>
    %c0_3 = arith.constant 0 : index
    %c0_4 = arith.constant 0 : index
    %c0_5 = arith.constant 0 : index
    %6 = vector.load %arg2[%c0_3, %c0_4, %c0_5] : memref<1x8x8xf32, #tpu.memory_space<vmem>>, vector<1x8x8xf32>
    %cst = arith.constant dense<0.000000e+00> : vector<8xf32>
    %7 = vector.multi_reduction <add>, %0, %cst [1] : vector<8x32xf32> to vector<8xf32>
    %8 = vector.shape_cast %7 : vector<8xf32> to vector<8x1xf32>
    %cst_6 = arith.constant 3.200000e+01 : f32
    %9 = vector.broadcast %cst_6 : f32 to vector<8x1xf32>
    %10 = arith.divf %8, %9 : vector<8x1xf32>
    %11 = vector.broadcast %10 : vector<8x1xf32> to vector<8x32xf32>
    %12 = arith.subf %0, %11 : vector<8x32xf32>
    %13 = arith.mulf %12, %12 : vector<8x32xf32>
    %cst_7 = arith.constant dense<0.000000e+00> : vector<8xf32>
    %14 = vector.multi_reduction <add>, %13, %cst_7 [1] : vector<8x32xf32> to vector<8xf32>
    %15 = vector.shape_cast %14 : vector<8xf32> to vector<8x1xf32>
    %cst_8 = arith.constant 3.200000e+01 : f32
    %16 = vector.broadcast %cst_8 : f32 to vector<8x1xf32>
    %17 = arith.divf %15, %16 : vector<8x1xf32>
    %18 = vector.broadcast %10 : vector<8x1xf32> to vector<8x32xf32>
    %19 = arith.subf %0, %18 : vector<8x32xf32>
    %cst_9 = arith.constant 9.99999974E-6 : f32
    %20 = vector.broadcast %cst_9 : f32 to vector<8x1xf32>
    %21 = arith.addf %17, %20 : vector<8x1xf32>
    %22 = math.rsqrt %21 : vector<8x1xf32>
    %23 = vector.broadcast %22 : vector<8x1xf32> to vector<8x32xf32>
    %24 = arith.mulf %19, %23 : vector<8x32xf32>
    %25 = vector.broadcast %2 : vector<1x32xf32> to vector<8x32xf32>
    %26 = arith.mulf %24, %25 : vector<8x32xf32>
    %27 = vector.broadcast %3 : vector<1x32xf32> to vector<8x32xf32>
    %28 = arith.addf %26, %27 : vector<8x32xf32>
    %c0_10 = arith.constant 0 : index
    %c0_11 = arith.constant 0 : index
    %29 = vector.load %arg4[%c0_10, %c0_11] : memref<32x96xf32, #tpu.memory_space<vmem>>, vector<32x96xf32>
    %cst_12 = arith.constant dense<0.000000e+00> : vector<8x96xf32>
    %30 = tpu.matmul %28, %29, %cst_12 {dimension_numbers = #tpu.dot_dimension_numbers<[1], [0], [0], [1], [0, 0, 1, 1], [], []>} : vector<8x32xf32>, vector<32x96xf32>, vector<8x96xf32> -> vector<8x96xf32>
    %c0_13 = arith.constant 0 : index
    %c0_14 = arith.constant 0 : index
    %31 = vector.load %arg5[%c0_13, %c0_14] : memref<1x96xf32, #tpu.memory_space<vmem>>, vector<1x96xf32>
    %32 = vector.broadcast %31 : vector<1x96xf32> to vector<8x96xf32>
    %33 = arith.addf %30, %32 : vector<8x96xf32>
    %34 = vector.extract_strided_slice %33 {offsets = [0, 0], sizes = [8, 8], strides = [1, 1]} : vector<8x96xf32> to vector<8x8xf32>
    %35 = vector.shape_cast %34 : vector<8x8xf32> to vector<1x8x8xf32>
    %36 = vector.extract_strided_slice %33 {offsets = [0, 32], sizes = [8, 8], strides = [1, 1]} : vector<8x96xf32> to vector<8x8xf32>
    %37 = vector.shape_cast %36 : vector<8x8xf32> to vector<1x8x8xf32>
    %38 = vector.extract_strided_slice %33 {offsets = [0, 64], sizes = [8, 8], strides = [1, 1]} : vector<8x96xf32> to vector<8x8xf32>
    %39 = vector.shape_cast %38 : vector<8x8xf32> to vector<1x8x8xf32>
    "tpu.trace_start"() <{level = 10 : i32, message = "btd,bsd->bts"}> : () -> ()
    %cst_15 = arith.constant dense<0.000000e+00> : vector<1x8x8xf32>
    %40 = tpu.matmul %35, %37, %cst_15 {dimension_numbers = #tpu.dot_dimension_numbers<[2], [2], [1], [1], [0, 0, 0, 1, 1, 1], [0], [0]>} : vector<1x8x8xf32>, vector<1x8x8xf32>, vector<1x8x8xf32> -> vector<1x8x8xf32>
    "tpu.trace_stop"() : () -> ()
    %cst_16 = arith.constant 0.353553385 : f32
    %41 = vector.broadcast %cst_16 : f32 to vector<1x8x8xf32>
    %42 = arith.mulf %40, %41 : vector<1x8x8xf32>
    %43 = arith.addf %42, %6 : vector<1x8x8xf32>
    %cst_17 = arith.constant dense<0xFF800000> : vector<1x8xf32>
    %44 = vector.multi_reduction <maximumf>, %43, %cst_17 [2] : vector<1x8x8xf32> to vector<1x8xf32>
    %45 = vector.shape_cast %44 : vector<1x8xf32> to vector<1x8x1xf32>
    %46 = vector.broadcast %45 : vector<1x8x1xf32> to vector<1x8x8xf32>
    %47 = arith.subf %43, %46 : vector<1x8x8xf32>
    %48 = math.exp %47 : vector<1x8x8xf32>
    %cst_18 = arith.constant dense<0.000000e+00> : vector<1x8xf32>
    %49 = vector.multi_reduction <add>, %48, %cst_18 [2] : vector<1x8x8xf32> to vector<1x8xf32>
    %50 = vector.shape_cast %49 : vector<1x8xf32> to vector<1x8x1xf32>
    %51 = vector.broadcast %50 : vector<1x8x1xf32> to vector<1x8x8xf32>
    %52 = arith.divf %48, %51 : vector<1x8x8xf32>
    "tpu.trace_start"() <{level = 10 : i32, message = "bts,bsd->btd"}> : () -> ()
    %cst_19 = arith.constant dense<0.000000e+00> : vector<1x8x8xf32>
    %53 = tpu.matmul %52, %39, %cst_19 {dimension_numbers = #tpu.dot_dimension_numbers<[2], [1], [1], [2], [0, 0, 0, 1, 1, 2], [0], [0]>} : vector<1x8x8xf32>, vector<1x8x8xf32>, vector<1x8x8xf32> -> vector<1x8x8xf32>
    "tpu.trace_stop"() : () -> ()
    %54 = vector.shape_cast %53 : vector<1x8x8xf32> to vector<8x8xf32>
    %55 = vector.extract_strided_slice %33 {offsets = [0, 8], sizes = [8, 8], strides = [1, 1]} : vector<8x96xf32> to vector<8x8xf32>
    %56 = vector.shape_cast %55 : vector<8x8xf32> to vector<1x8x8xf32>
    %57 = vector.extract_strided_slice %33 {offsets = [0, 40], sizes = [8, 8], strides = [1, 1]} : vector<8x96xf32> to vector<8x8xf32>
    %58 = vector.shape_cast %57 : vector<8x8xf32> to vector<1x8x8xf32>
    %59 = vector.extract_strided_slice %33 {offsets = [0, 72], sizes = [8, 8], strides = [1, 1]} : vector<8x96xf32> to vector<8x8xf32>
    %60 = vector.shape_cast %59 : vector<8x8xf32> to vector<1x8x8xf32>
    "tpu.trace_start"() <{level = 10 : i32, message = "btd,bsd->bts"}> : () -> ()
    %cst_20 = arith.constant dense<0.000000e+00> : vector<1x8x8xf32>
    %61 = tpu.matmul %56, %58, %cst_20 {dimension_numbers = #tpu.dot_dimension_numbers<[2], [2], [1], [1], [0, 0, 0, 1, 1, 1], [0], [0]>} : vector<1x8x8xf32>, vector<1x8x8xf32>, vector<1x8x8xf32> -> vector<1x8x8xf32>
    "tpu.trace_stop"() : () -> ()
    %cst_21 = arith.constant 0.353553385 : f32
    %62 = vector.broadcast %cst_21 : f32 to vector<1x8x8xf32>
    %63 = arith.mulf %61, %62 : vector<1x8x8xf32>
    %64 = arith.addf %63, %6 : vector<1x8x8xf32>
    %cst_22 = arith.constant dense<0xFF800000> : vector<1x8xf32>
    %65 = vector.multi_reduction <maximumf>, %64, %cst_22 [2] : vector<1x8x8xf32> to vector<1x8xf32>
    %66 = vector.shape_cast %65 : vector<1x8xf32> to vector<1x8x1xf32>
    %67 = vector.broadcast %66 : vector<1x8x1xf32> to vector<1x8x8xf32>
    %68 = arith.subf %64, %67 : vector<1x8x8xf32>
    %69 = math.exp %68 : vector<1x8x8xf32>
    %cst_23 = arith.constant dense<0.000000e+00> : vector<1x8xf32>
    %70 = vector.multi_reduction <add>, %69, %cst_23 [2] : vector<1x8x8xf32> to vector<1x8xf32>
    %71 = vector.shape_cast %70 : vector<1x8xf32> to vector<1x8x1xf32>
    %72 = vector.broadcast %71 : vector<1x8x1xf32> to vector<1x8x8xf32>
    %73 = arith.divf %69, %72 : vector<1x8x8xf32>
    "tpu.trace_start"() <{level = 10 : i32, message = "bts,bsd->btd"}> : () -> ()
    %cst_24 = arith.constant dense<0.000000e+00> : vector<1x8x8xf32>
    %74 = tpu.matmul %73, %60, %cst_24 {dimension_numbers = #tpu.dot_dimension_numbers<[2], [1], [1], [2], [0, 0, 0, 1, 1, 2], [0], [0]>} : vector<1x8x8xf32>, vector<1x8x8xf32>, vector<1x8x8xf32> -> vector<1x8x8xf32>
    "tpu.trace_stop"() : () -> ()
    %75 = vector.shape_cast %74 : vector<1x8x8xf32> to vector<8x8xf32>
    %76 = vector.extract_strided_slice %33 {offsets = [0, 16], sizes = [8, 8], strides = [1, 1]} : vector<8x96xf32> to vector<8x8xf32>
    %77 = vector.shape_cast %76 : vector<8x8xf32> to vector<1x8x8xf32>
    %78 = vector.extract_strided_slice %33 {offsets = [0, 48], sizes = [8, 8], strides = [1, 1]} : vector<8x96xf32> to vector<8x8xf32>
    %79 = vector.shape_cast %78 : vector<8x8xf32> to vector<1x8x8xf32>
    %80 = vector.extract_strided_slice %33 {offsets = [0, 80], sizes = [8, 8], strides = [1, 1]} : vector<8x96xf32> to vector<8x8xf32>
    %81 = vector.shape_cast %80 : vector<8x8xf32> to vector<1x8x8xf32>
    "tpu.trace_start"() <{level = 10 : i32, message = "btd,bsd->bts"}> : () -> ()
    %cst_25 = arith.constant dense<0.000000e+00> : vector<1x8x8xf32>
    %82 = tpu.matmul %77, %79, %cst_25 {dimension_numbers = #tpu.dot_dimension_numbers<[2], [2], [1], [1], [0, 0, 0, 1, 1, 1], [0], [0]>} : vector<1x8x8xf32>, vector<1x8x8xf32>, vector<1x8x8xf32> -> vector<1x8x8xf32>
    "tpu.trace_stop"() : () -> ()
    %cst_26 = arith.constant 0.353553385 : f32
    %83 = vector.broadcast %cst_26 : f32 to vector<1x8x8xf32>
    %84 = arith.mulf %82, %83 : vector<1x8x8xf32>
    %85 = arith.addf %84, %6 : vector<1x8x8xf32>
    %cst_27 = arith.constant dense<0xFF800000> : vector<1x8xf32>
    %86 = vector.multi_reduction <maximumf>, %85, %cst_27 [2] : vector<1x8x8xf32> to vector<1x8xf32>
    %87 = vector.shape_cast %86 : vector<1x8xf32> to vector<1x8x1xf32>
    %88 = vector.broadcast %87 : vector<1x8x1xf32> to vector<1x8x8xf32>
    %89 = arith.subf %85, %88 : vector<1x8x8xf32>
    %90 = math.exp %89 : vector<1x8x8xf32>
    %cst_28 = arith.constant dense<0.000000e+00> : vector<1x8xf32>
    %91 = vector.multi_reduction <add>, %90, %cst_28 [2] : vector<1x8x8xf32> to vector<1x8xf32>
    %92 = vector.shape_cast %91 : vector<1x8xf32> to vector<1x8x1xf32>
    %93 = vector.broadcast %92 : vector<1x8x1xf32> to vector<1x8x8xf32>
    %94 = arith.divf %90, %93 : vector<1x8x8xf32>
    "tpu.trace_start"() <{level = 10 : i32, message = "bts,bsd->btd"}> : () -> ()
    %cst_29 = arith.constant dense<0.000000e+00> : vector<1x8x8xf32>
    %95 = tpu.matmul %94, %81, %cst_29 {dimension_numbers = #tpu.dot_dimension_numbers<[2], [1], [1], [2], [0, 0, 0, 1, 1, 2], [0], [0]>} : vector<1x8x8xf32>, vector<1x8x8xf32>, vector<1x8x8xf32> -> vector<1x8x8xf32>
    "tpu.trace_stop"() : () -> ()
    %96 = vector.shape_cast %95 : vector<1x8x8xf32> to vector<8x8xf32>
    %97 = vector.extract_strided_slice %33 {offsets = [0, 24], sizes = [8, 8], strides = [1, 1]} : vector<8x96xf32> to vector<8x8xf32>
    %98 = vector.shape_cast %97 : vector<8x8xf32> to vector<1x8x8xf32>
    %99 = vector.extract_strided_slice %33 {offsets = [0, 56], sizes = [8, 8], strides = [1, 1]} : vector<8x96xf32> to vector<8x8xf32>
    %100 = vector.shape_cast %99 : vector<8x8xf32> to vector<1x8x8xf32>
    %101 = vector.extract_strided_slice %33 {offsets = [0, 88], sizes = [8, 8], strides = [1, 1]} : vector<8x96xf32> to vector<8x8xf32>
    %102 = vector.shape_cast %101 : vector<8x8xf32> to vector<1x8x8xf32>
    "tpu.trace_start"() <{level = 10 : i32, message = "btd,bsd->bts"}> : () -> ()
    %cst_30 = arith.constant dense<0.000000e+00> : vector<1x8x8xf32>
    %103 = tpu.matmul %98, %100, %cst_30 {dimension_numbers = #tpu.dot_dimension_numbers<[2], [2], [1], [1], [0, 0, 0, 1, 1, 1], [0], [0]>} : vector<1x8x8xf32>, vector<1x8x8xf32>, vector<1x8x8xf32> -> vector<1x8x8xf32>
    "tpu.trace_stop"() : () -> ()
    %cst_31 = arith.constant 0.353553385 : f32
    %104 = vector.broadcast %cst_31 : f32 to vector<1x8x8xf32>
    %105 = arith.mulf %103, %104 : vector<1x8x8xf32>
    %106 = arith.addf %105, %6 : vector<1x8x8xf32>
    %cst_32 = arith.constant dense<0xFF800000> : vector<1x8xf32>
    %107 = vector.multi_reduction <maximumf>, %106, %cst_32 [2] : vector<1x8x8xf32> to vector<1x8xf32>
    %108 = vector.shape_cast %107 : vector<1x8xf32> to vector<1x8x1xf32>
    %109 = vector.broadcast %108 : vector<1x8x1xf32> to vector<1x8x8xf32>
    %110 = arith.subf %106, %109 : vector<1x8x8xf32>
    %111 = math.exp %110 : vector<1x8x8xf32>
    %cst_33 = arith.constant dense<0.000000e+00> : vector<1x8xf32>
    %112 = vector.multi_reduction <add>, %111, %cst_33 [2] : vector<1x8x8xf32> to vector<1x8xf32>
    %113 = vector.shape_cast %112 : vector<1x8xf32> to vector<1x8x1xf32>
    %114 = vector.broadcast %113 : vector<1x8x1xf32> to vector<1x8x8xf32>
    %115 = arith.divf %111, %114 : vector<1x8x8xf32>
    "tpu.trace_start"() <{level = 10 : i32, message = "bts,bsd->btd"}> : () -> ()
    %cst_34 = arith.constant dense<0.000000e+00> : vector<1x8x8xf32>
    %116 = tpu.matmul %115, %102, %cst_34 {dimension_numbers = #tpu.dot_dimension_numbers<[2], [1], [1], [2], [0, 0, 0, 1, 1, 2], [0], [0]>} : vector<1x8x8xf32>, vector<1x8x8xf32>, vector<1x8x8xf32> -> vector<1x8x8xf32>
    "tpu.trace_stop"() : () -> ()
    %117 = vector.shape_cast %116 : vector<1x8x8xf32> to vector<8x8xf32>
    %118 = tpu.concatenate %54, %75, %96, %117 in 1 : vector<8x8xf32>, vector<8x8xf32>, vector<8x8xf32>, vector<8x8xf32> -> vector<8x32xf32>
    %119 = arith.addf %118, %0 : vector<8x32xf32>
    %cst_35 = arith.constant dense<0.000000e+00> : vector<8xf32>
    %120 = vector.multi_reduction <add>, %119, %cst_35 [1] : vector<8x32xf32> to vector<8xf32>
    %121 = vector.shape_cast %120 : vector<8xf32> to vector<8x1xf32>
    %cst_36 = arith.constant 3.200000e+01 : f32
    %122 = vector.broadcast %cst_36 : f32 to vector<8x1xf32>
    %123 = arith.divf %121, %122 : vector<8x1xf32>
    %124 = vector.broadcast %123 : vector<8x1xf32> to vector<8x32xf32>
    %125 = arith.subf %119, %124 : vector<8x32xf32>
    %126 = arith.mulf %125, %125 : vector<8x32xf32>
    %cst_37 = arith.constant dense<0.000000e+00> : vector<8xf32>
    %127 = vector.multi_reduction <add>, %126, %cst_37 [1] : vector<8x32xf32> to vector<8xf32>
    %128 = vector.shape_cast %127 : vector<8xf32> to vector<8x1xf32>
    %cst_38 = arith.constant 3.200000e+01 : f32
    %129 = vector.broadcast %cst_38 : f32 to vector<8x1xf32>
    %130 = arith.divf %128, %129 : vector<8x1xf32>
    %131 = vector.broadcast %123 : vector<8x1xf32> to vector<8x32xf32>
    %132 = arith.subf %119, %131 : vector<8x32xf32>
    %cst_39 = arith.constant 9.99999974E-6 : f32
    %133 = vector.broadcast %cst_39 : f32 to vector<8x1xf32>
    %134 = arith.addf %130, %133 : vector<8x1xf32>
    %135 = math.rsqrt %134 : vector<8x1xf32>
    %136 = vector.broadcast %135 : vector<8x1xf32> to vector<8x32xf32>
    %137 = arith.mulf %132, %136 : vector<8x32xf32>
    %138 = vector.broadcast %4 : vector<1x32xf32> to vector<8x32xf32>
    %139 = arith.mulf %137, %138 : vector<8x32xf32>
    %140 = vector.broadcast %5 : vector<1x32xf32> to vector<8x32xf32>
    %141 = arith.addf %139, %140 : vector<8x32xf32>
    %c0_40 = arith.constant 0 : index
    %c0_41 = arith.constant 0 : index
    %142 = vector.load %arg6[%c0_40, %c0_41] : memref<32x64xf32, #tpu.memory_space<vmem>>, vector<32x64xf32>
    %cst_42 = arith.constant dense<0.000000e+00> : vector<8x64xf32>
    %143 = tpu.matmul %141, %142, %cst_42 {dimension_numbers = #tpu.dot_dimension_numbers<[1], [0], [0], [1], [0, 0, 1, 1], [], []>} : vector<8x32xf32>, vector<32x64xf32>, vector<8x64xf32> -> vector<8x64xf32>
    %c0_43 = arith.constant 0 : index
    %c0_44 = arith.constant 0 : index
    %144 = vector.load %arg7[%c0_43, %c0_44] : memref<1x64xf32, #tpu.memory_space<vmem>>, vector<1x64xf32>
    %145 = vector.broadcast %144 : vector<1x64xf32> to vector<8x64xf32>
    %146 = arith.addf %143, %145 : vector<8x64xf32>
    %cst_45 = arith.constant 0.000000e+00 : f32
    %147 = vector.broadcast %cst_45 : f32 to vector<8x64xf32>
    %148 = arith.maximumf %146, %147 : vector<8x64xf32>
    %c0_46 = arith.constant 0 : index
    %c0_47 = arith.constant 0 : index
    %149 = vector.load %arg8[%c0_46, %c0_47] : memref<64x32xf32, #tpu.memory_space<vmem>>, vector<64x32xf32>
    %cst_48 = arith.constant dense<0.000000e+00> : vector<8x32xf32>
    %150 = tpu.matmul %148, %149, %cst_48 {dimension_numbers = #tpu.dot_dimension_numbers<[1], [0], [0], [1], [0, 0, 1, 1], [], []>} : vector<8x64xf32>, vector<64x32xf32>, vector<8x32xf32> -> vector<8x32xf32>
    %c0_49 = arith.constant 0 : index
    %c0_50 = arith.constant 0 : index
    %151 = vector.load %arg9[%c0_49, %c0_50] : memref<1x32xf32, #tpu.memory_space<vmem>>, vector<1x32xf32>
    %152 = vector.broadcast %151 : vector<1x32xf32> to vector<8x32xf32>
    %153 = arith.addf %150, %152 : vector<8x32xf32>
    %154 = arith.addf %153, %119 : vector<8x32xf32>
    %c0_51 = arith.constant 0 : index
    %c0_52 = arith.constant 0 : index
    %155 = vector.load %arg10[%c0_51, %c0_52] : memref<8x32xf32, #tpu.memory_space<vmem>>, vector<8x32xf32>
    tpu.vector_store %arg10[%c0_51, %c0_52], %154 {strides = array<i32>} : memref<8x32xf32, #tpu.memory_space<vmem>>, vector<8x32xf32>,
    %156 = vector.shape_cast %52 : vector<1x8x8xf32> to vector<1x64xf32>
    %157 = vector.shape_cast %73 : vector<1x8x8xf32> to vector<1x64xf32>
    %158 = vector.shape_cast %94 : vector<1x8x8xf32> to vector<1x64xf32>
    %159 = vector.shape_cast %115 : vector<1x8x8xf32> to vector<1x64xf32>
    %160 = tpu.concatenate %156, %157, %158, %159 in 1 : vector<1x64xf32>, vector<1x64xf32>, vector<1x64xf32>, vector<1x64xf32> -> vector<1x256xf32>
    %161 = vector.shape_cast %160 : vector<1x256xf32> to vector<1x2x128xf32>
    %c0_53 = arith.constant 0 : index
    %c0_54 = arith.constant 0 : index
    %c0_55 = arith.constant 0 : index
    %162 = vector.load %arg11[%c0_53, %c0_54, %c0_55] : memref<1x2x128xf32, #tpu.memory_space<vmem>>, vector<1x2x128xf32>
    tpu.vector_store %arg11[%c0_53, %c0_54, %c0_55], %161 {strides = array<i32>} : memref<1x2x128xf32, #tpu.memory_space<vmem>>, vector<1x2x128xf32>,
    return
  }
  func.func @transform_0(%arg0: i32) -> (i32, i32) {
    %c0_i32 = arith.constant 0 : i32
    %c0_i32_0 = arith.constant 0 : i32
    return %arg0, %c0_i32 : i32, i32
  }
  func.func @transform_1(%arg0: i32) -> (i32, i32, i32) {
    %c0_i32 = arith.constant 0 : i32
    %c0_i32_0 = arith.constant 0 : i32
    %c0_i32_1 = arith.constant 0 : i32
    return %arg0, %c0_i32, %c0_i32_0 : i32, i32, i32
  }
  func.func @transform_2(%arg0: i32) -> (i32, i32) {
    %c0_i32 = arith.constant 0 : i32
    %c0_i32_0 = arith.constant 0 : i32
    %c0_i32_1 = arith.constant 0 : i32
    return %c0_i32, %c0_i32_0 : i32, i32
  }
  func.func @transform_3(%arg0: i32) -> (i32, i32) {
    %c0_i32 = arith.constant 0 : i32
    %c0_i32_0 = arith.constant 0 : i32
    %c0_i32_1 = arith.constant 0 : i32
    return %c0_i32, %c0_i32_0 : i32, i32
  }
  func.func @transform_4(%arg0: i32) -> (i32, i32) {
    %c0_i32 = arith.constant 0 : i32
    %c0_i32_0 = arith.constant 0 : i32
    %c0_i32_1 = arith.constant 0 : i32
    return %c0_i32, %c0_i32_0 : i32, i32
  }
  func.func @transform_5(%arg0: i32) -> (i32, i32) {
    %c0_i32 = arith.constant 0 : i32
    %c0_i32_0 = arith.constant 0 : i32
    %c0_i32_1 = arith.constant 0 : i32
    return %c0_i32, %c0_i32_0 : i32, i32
  }
  func.func @transform_6(%arg0: i32) -> (i32, i32) {
    %c0_i32 = arith.constant 0 : i32
    %c0_i32_0 = arith.constant 0 : i32
    %c0_i32_1 = arith.constant 0 : i32
    return %c0_i32, %c0_i32_0 : i32, i32
  }
  func.func @transform_7(%arg0: i32) -> (i32, i32) {
    %c0_i32 = arith.constant 0 : i32
    %c0_i32_0 = arith.constant 0 : i32
    %c0_i32_1 = arith.constant 0 : i32
    return %c0_i32, %c0_i32_0 : i32, i32
  }
  func.func @transform_8(%arg0: i32) -> (i32, i32) {
    %c0_i32 = arith.constant 0 : i32
    %c0_i32_0 = arith.constant 0 : i32
    %c0_i32_1 = arith.constant 0 : i32
    return %c0_i32, %c0_i32_0 : i32, i32
  }
  func.func @transform_9(%arg0: i32) -> (i32, i32) {
    %c0_i32 = arith.constant 0 : i32
    %c0_i32_0 = arith.constant 0 : i32
    return %arg0, %c0_i32 : i32, i32
  }
  func.func @transform_10(%arg0: i32) -> (i32, i32, i32) {
    %c0_i32 = arith.constant 0 : i32
    %c0_i32_0 = arith.constant 0 : i32
    %c0_i32_1 = arith.constant 0 : i32
    return %arg0, %c0_i32, %c0_i32_0 : i32, i32, i32
  }
}

</mosaic_0001>

<llo_original>
// kernel: tpu_custom_call.1
$region0: #{tpu_custom_call.1}
  #allocation0 [shape = 'u32[]', space=smem, size = 0x4, offset = 0x4, fixed_abs, tag = 'smem constant byte address 0x4 - core index']
  #allocation1 [shape = 'u32[144,128]{1,0:T(1,128)}', space=vmem, size = 0x12000, scoped, tag = 'internal scratch']
  %s0 = inlined_call_operand.vmem [shape: f32[16,32], index: 0, kind: input, shape index: {}]
  %s1 = inlined_call_operand.vmem [shape: f32[2,8,8], index: 1, kind: input, shape index: {}]
  %s2 = inlined_call_operand.vmem [shape: f32[4,32], index: 2, kind: input, shape index: {}]
  %s3 = inlined_call_operand.vmem [shape: f32[32,96], index: 3, kind: input, shape index: {}]
  %s4 = inlined_call_operand.vmem [shape: f32[1,96], index: 4, kind: input, shape index: {}]
  %s5 = inlined_call_operand.vmem [shape: f32[32,64], index: 5, kind: input, shape index: {}]
  %s6 = inlined_call_operand.vmem [shape: f32[1,64], index: 6, kind: input, shape index: {}]
  %s7 = inlined_call_operand.vmem [shape: f32[64,32], index: 7, kind: input, shape index: {}]
  %s8 = inlined_call_operand.vmem [shape: f32[1,32], index: 8, kind: input, shape index: {}]
  %s9 = inlined_call_operand.hbm [shape: f32[16,32], index: 9, kind: output, shape index: {0}]
  %s10 = inlined_call_operand.hbm [shape: f32[2,2,128], index: 10, kind: output, shape index: {1}]
  %11 = xla_tuple %s9, %s10
  %s12 = sld [smem:[#allocation0]]
  $region77: #{tpu_custom_call.1} parent=0
    _
  %s14 = ssub.s32 1, %s12
  %s15 = scalar_select 0, %s14, %s12
  $region1: #{tpu_custom_call.1} parent=0
    #allocation2 [shape = 'u8[8192]{0}', space=vmem, size = 0x2000, scoped, tag = 'output window, operand 0']
    #allocation3 [shape = 's32[2]{0}', space=sflag, size = 0x8, scoped, tag = 'scoped memory for tpu_custom_call.1']
    #allocation4 [shape = 'u8[2048]{0}', space=vmem, size = 0x800, scoped, tag = 'output window, operand 1']
    #allocation5 [shape = 's32[2]{0}', space=sflag, size = 0x8, scoped, tag = 'scoped memory for tpu_custom_call.1']
    %16 = vsyncpa [#allocation3], 0
    %s17 = scalar_lea.sflag [#allocation3], 1
    %18 = vsyncpa %s17, 0
    %19 = vsyncpa [#allocation5], 0
    %s20 = scalar_lea.sflag [#allocation5], 1
    %21 = vsyncpa %s20, 0
    loop: start=0, step=1, limit=4
    $region2: #{tpu_custom_call.1} parent=1 // loop_pre_header
      _
    $region3: #{tpu_custom_call.1} parent=1 // loop_header
      %s23 = sphi 0, %s27
      %p24 = scmp.ge.s32.totalorder %s23, 4
      %s33 = sphi 0, %s35
      %s36 = sphi 0, %s33
      %s37 = sphi 0, %s36
      %s53 = sphi 0, %s37
      %s59 = sphi 0, %s61
      %s62 = sphi 0, %s59
      %s63 = sphi 0, %s62
      %s79 = sphi 0, %s63
      %s83 = sphi 0, %s83
      %s85 = sphi 0, %s83
      %s86 = sphi 0, %s85
      %s100 = sphi 0, %s86
      %s104 = sphi 0, %s104
      %s106 = sphi 0, %s104
      %s107 = sphi 0, %s106
      %s121 = sphi 0, %s107
      %s125 = sphi 0, %s125
      %s127 = sphi 0, %s125
      %s128 = sphi 0, %s127
      %s142 = sphi 0, %s128
      %s146 = sphi 0, %s146
      %s148 = sphi 0, %s146
      %s149 = sphi 0, %s148
      %s163 = sphi 0, %s149
      %s167 = sphi 0, %s167
      %s169 = sphi 0, %s167
      %s170 = sphi 0, %s169
      %s184 = sphi 0, %s170
      %s188 = sphi 0, %s188
      %s190 = sphi 0, %s188
      %s191 = sphi 0, %s190
      %s205 = sphi 0, %s191
      %s209 = sphi 0, %s209
      %s211 = sphi 0, %s209
      %s212 = sphi 0, %s211
      %s226 = sphi 0, %s212
      %s232 = sphi 0, %s234
      %s235 = sphi 0, %s232
      %s236 = sphi 0, %s235
      %s252 = sphi 0, %s236
      %s258 = sphi 0, %s260
      %s261 = sphi 0, %s258
      %s262 = sphi 0, %s261
      %s278 = sphi 0, %s262
    $region4: #{tpu_custom_call.1} parent=1 // loop_header_branch
      %26 = sbr.rel (%p24) target = $region8
    $region5: #{tpu_custom_call.1} parent=1 // loop_body
      %s28 = ssub.s32 %s23, 1
      %s29 = ssub.s32 %s23, 2
      %s30 = sadd.s32 %s23, 1
      %s31 = ssub.s32 %s23, %s30
      %p32 = scmp.eq.s32.totalorder %s31, 0
      %s34 = sadd.s32 %s33, 1
      %s35 = scalar_select %p32, %s33, %s34
      %p38 = pneg %p32
      %p39 = scmp.eq.s32.totalorder %s23, 1
      %p40 = por %p38, %p39
      %p41 = scmp.ne.s32.totalorder %s33, %s36
      %p42 = scmp.eq.s32.totalorder %s23, 0
      %p43 = por %p41, %p42
      %p44 = scmp.ne.s32.totalorder %s33, %s36
      %p45 = scmp.eq.s32.totalorder %s28, 1
      %p46 = por %p44, %p45
      %p47 = scmp.ne.s32.totalorder %s36, %s37
      %p48 = scmp.eq.s32.totalorder %s28, 0
      %p49 = por %p47, %p48
      %p50 = scmp.ne.s32.totalorder %s36, %s37
      %p51 = scmp.eq.s32.totalorder %s29, 1
      %p52 = por %p50, %p51
      %p54 = scmp.ne.s32.totalorder %s37, %s53
      %p55 = scmp.eq.s32.totalorder %s29, 0
      %p56 = por %p54, %p55
      %s57 = ssub.s32 %s23, %s30
      %p58 = scmp.eq.s32.totalorder %s57, 0
      %s60 = sadd.s32 %s59, 1
      %s61 = scalar_select %p58, %s59, %s60
      %p64 = pneg %p58
      %p65 = scmp.eq.s32.totalorder %s23, 1
      %p66 = por %p64, %p65
      %p67 = scmp.ne.s32.totalorder %s59, %s62
      %p68 = scmp.eq.s32.totalorder %s23, 0
      %p69 = por %p67, %p68
      %p70 = scmp.ne.s32.totalorder %s59, %s62
      %p71 = scmp.eq.s32.totalorder %s28, 1
      %p72 = por %p70, %p71
      %p73 = scmp.ne.s32.totalorder %s62, %s63
      %p74 = scmp.eq.s32.totalorder %s28, 0
      %p75 = por %p73, %p74
      %p76 = scmp.ne.s32.totalorder %s62, %s63
      %p77 = scmp.eq.s32.totalorder %s29, 1
      %p78 = por %p76, %p77
      %p80 = scmp.ne.s32.totalorder %s63, %s79
      %p81 = scmp.eq.s32.totalorder %s29, 0
      %p82 = por %p80, %p81
      %s84 = sadd.s32 %s83, 1
      %p87 = scmp.eq.s32.totalorder %s23, 1
      %p88 = scmp.ne.s32.totalorder %s83, %s85
      %p89 = scmp.eq.s32.totalorder %s23, 0
      %p90 = por %p88, %p89
      %p91 = scmp.ne.s32.totalorder %s83, %s85
      %p92 = scmp.eq.s32.totalorder %s28, 1
      %p93 = por %p91, %p92
      %p94 = scmp.ne.s32.totalorder %s85, %s86
      %p95 = scmp.eq.s32.totalorder %s28, 0
      %p96 = por %p94, %p95
      %p97 = scmp.ne.s32.totalorder %s85, %s86
      %p98 = scmp.eq.s32.totalorder %s29, 1
      %p99 = por %p97, %p98
      %p101 = scmp.ne.s32.totalorder %s86, %s100
      %p102 = scmp.eq.s32.totalorder %s29, 0
      %p103 = por %p101, %p102
      %s105 = sadd.s32 %s104, 1
      %p108 = scmp.eq.s32.totalorder %s23, 1
      %p109 = scmp.ne.s32.totalorder %s104, %s106
      %p110 = scmp.eq.s32.totalorder %s23, 0
      %p111 = por %p109, %p110
      %p112 = scmp.ne.s32.totalorder %s104, %s106
      %p113 = scmp.eq.s32.totalorder %s28, 1
      %p114 = por %p112, %p113
      %p115 = scmp.ne.s32.totalorder %s106, %s107
      %p116 = scmp.eq.s32.totalorder %s28, 0
      %p117 = por %p115, %p116
      %p118 = scmp.ne.s32.totalorder %s106, %s107
      %p119 = scmp.eq.s32.totalorder %s29, 1
      %p120 = por %p118, %p119
      %p122 = scmp.ne.s32.totalorder %s107, %s121
      %p123 = scmp.eq.s32.totalorder %s29, 0
      %p124 = por %p122, %p123
      %s126 = sadd.s32 %s125, 1
      %p129 = scmp.eq.s32.totalorder %s23, 1
      %p130 = scmp.ne.s32.totalorder %s125, %s127
      %p131 = scmp.eq.s32.totalorder %s23, 0
      %p132 = por %p130, %p131
      %p133 = scmp.ne.s32.totalorder %s125, %s127
      %p134 = scmp.eq.s32.totalorder %s28, 1
      %p135 = por %p133, %p134
      %p136 = scmp.ne.s32.totalorder %s127, %s128
      %p137 = scmp.eq.s32.totalorder %s28, 0
      %p138 = por %p136, %p137
      %p139 = scmp.ne.s32.totalorder %s127, %s128
      %p140 = scmp.eq.s32.totalorder %s29, 1
      %p141 = por %p139, %p140
      %p143 = scmp.ne.s32.totalorder %s128, %s142
      %p144 = scmp.eq.s32.totalorder %s29, 0
      %p145 = por %p143, %p144
      %s147 = sadd.s32 %s146, 1
      %p150 = scmp.eq.s32.totalorder %s23, 1
      %p151 = scmp.ne.s32.totalorder %s146, %s148
      %p152 = scmp.eq.s32.totalorder %s23, 0
      %p153 = por %p151, %p152
      %p154 = scmp.ne.s32.totalorder %s146, %s148
      %p155 = scmp.eq.s32.totalorder %s28, 1
      %p156 = por %p154, %p155
      %p157 = scmp.ne.s32.totalorder %s148, %s149
      %p158 = scmp.eq.s32.totalorder %s28, 0
      %p159 = por %p157, %p158
      %p160 = scmp.ne.s32.totalorder %s148, %s149
      %p161 = scmp.eq.s32.totalorder %s29, 1
      %p162 = por %p160, %p161
      %p164 = scmp.ne.s32.totalorder %s149, %s163
      %p165 = scmp.eq.s32.totalorder %s29, 0
      %p166 = por %p164, %p165
      %s168 = sadd.s32 %s167, 1
      %p171 = scmp.eq.s32.totalorder %s23, 1
      %p172 = scmp.ne.s32.totalorder %s167, %s169
      %p173 = scmp.eq.s32.totalorder %s23, 0
      %p174 = por %p172, %p173
      %p175 = scmp.ne.s32.totalorder %s167, %s169
      %p176 = scmp.eq.s32.totalorder %s28, 1
      %p177 = por %p175, %p176
      %p178 = scmp.ne.s32.totalorder %s169, %s170
      %p179 = scmp.eq.s32.totalorder %s28, 0
      %p180 = por %p178, %p179
      %p181 = scmp.ne.s32.totalorder %s169, %s170
      %p182 = scmp.eq.s32.totalorder %s29, 1
      %p183 = por %p181, %p182
      %p185 = scmp.ne.s32.totalorder %s170, %s184
      %p186 = scmp.eq.s32.totalorder %s29, 0
      %p187 = por %p185, %p186
      %s189 = sadd.s32 %s188, 1
      %p192 = scmp.eq.s32.totalorder %s23, 1
      %p193 = scmp.ne.s32.totalorder %s188, %s190
      %p194 = scmp.eq.s32.totalorder %s23, 0
      %p195 = por %p193, %p194
      %p196 = scmp.ne.s32.totalorder %s188, %s190
      %p197 = scmp.eq.s32.totalorder %s28, 1
      %p198 = por %p196, %p197
      %p199 = scmp.ne.s32.totalorder %s190, %s191
      %p200 = scmp.eq.s32.totalorder %s28, 0
      %p201 = por %p199, %p200
      %p202 = scmp.ne.s32.totalorder %s190, %s191
      %p203 = scmp.eq.s32.totalorder %s29, 1
      %p204 = por %p202, %p203
      %p206 = scmp.ne.s32.totalorder %s191, %s205
      %p207 = scmp.eq.s32.totalorder %s29, 0
      %p208 = por %p206, %p207
      %s210 = sadd.s32 %s209, 1
      %p213 = scmp.eq.s32.totalorder %s23, 1
      %p214 = scmp.ne.s32.totalorder %s209, %s211
      %p215 = scmp.eq.s32.totalorder %s23, 0
      %p216 = por %p214, %p215
      %p217 = scmp.ne.s32.totalorder %s209, %s211
      %p218 = scmp.eq.s32.totalorder %s28, 1
      %p219 = por %p217, %p218
      %p220 = scmp.ne.s32.totalorder %s211, %s212
      %p221 = scmp.eq.s32.totalorder %s28, 0
      %p222 = por %p220, %p221
      %p223 = scmp.ne.s32.totalorder %s211, %s212
      %p224 = scmp.eq.s32.totalorder %s29, 1
      %p225 = por %p223, %p224
      %p227 = scmp.ne.s32.totalorder %s212, %s226
      %p228 = scmp.eq.s32.totalorder %s29, 0
      %p229 = por %p227, %p228
      %s230 = ssub.s32 %s23, %s30
      %p231 = scmp.eq.s32.totalorder %s230, 0
      %s233 = sadd.s32 %s232, 1
      %s234 = scalar_select %p231, %s232, %s233
      %p237 = pneg %p231
      %p238 = scmp.eq.s32.totalorder %s23, 1
      %p239 = por %p237, %p238
      %p240 = scmp.ne.s32.totalorder %s232, %s235
      %p241 = scmp.eq.s32.totalorder %s23, 0
      %p242 = por %p240, %p241
      %p243 = scmp.ne.s32.totalorder %s232, %s235
      %p244 = scmp.eq.s32.totalorder %s28, 1
      %p245 = por %p243, %p244
      %p246 = scmp.ne.s32.totalorder %s235, %s236
      %p247 = scmp.eq.s32.totalorder %s28, 0
      %p248 = por %p246, %p247
      %p249 = scmp.ne.s32.totalorder %s235, %s236
      %p250 = scmp.eq.s32.totalorder %s29, 1
      %p251 = por %p249, %p250
      %p253 = scmp.ne.s32.totalorder %s236, %s252
      %p254 = scmp.eq.s32.totalorder %s29, 0
      %p255 = por %p253, %p254
      %s256 = ssub.s32 %s23, %s30
      %p257 = scmp.eq.s32.totalorder %s256, 0
      %s259 = sadd.s32 %s258, 1
      %s260 = scalar_select %p257, %s258, %s259
      %p263 = pneg %p257
      %p264 = scmp.eq.s32.totalorder %s23, 1
      %p265 = por %p263, %p264
      %p266 = scmp.ne.s32.totalorder %s258, %s261
      %p267 = scmp.eq.s32.totalorder %s23, 0
      %p268 = por %p266, %p267
      %p269 = scmp.ne.s32.totalorder %s258, %s261
      %p270 = scmp.eq.s32.totalorder %s28, 1
      %p271 = por %p269, %p270
      %p272 = scmp.ne.s32.totalorder %s261, %s262
      %p273 = scmp.eq.s32.totalorder %s28, 0
      %p274 = por %p272, %p273
      %p275 = scmp.ne.s32.totalorder %s261, %s262
      %p276 = scmp.eq.s32.totalorder %s29, 1
      %p277 = por %p275, %p276
      %p279 = scmp.ne.s32.totalorder %s262, %s278
      %p280 = scmp.eq.s32.totalorder %s29, 0
      %p281 = por %p279, %p280
      %p282 = scmp.le.s32.totalorder 1, %s23
      %p283 = scmp.lt.s32.totalorder %s23, 3
      %p284 = pnand %p282, %p283
      %p285 = pneg %p284
      // Predicated region
      $region9: #{tpu_custom_call.1} parent=5 // pred_check
        _
      $region10: #{tpu_custom_call.1} parent=5 // pred_check_branch
        %287 = sbr.rel (%p284) target = $region12
      $region11: #{tpu_custom_call.1} parent=5 // pred_region
        %s288 = ssub.s32 %s23, 1
        // Predicated region
        $region13: #{tpu_custom_call.1} parent=11 // pred_check
          %p289 = pneg %p96
        $region14: #{tpu_custom_call.1} parent=11 // pred_check_branch
          %291 = sbr.rel (%p289) target = $region16
        $region15: #{tpu_custom_call.1} parent=11 // pred_region
          _
        $region16: #{tpu_custom_call.1} parent=11 // pred_fallthru
          _
        // Predicated region
        $region17: #{tpu_custom_call.1} parent=11 // pred_check
          %p292 = pneg %p117
        $region18: #{tpu_custom_call.1} parent=11 // pred_check_branch
          %294 = sbr.rel (%p292) target = $region20
        $region19: #{tpu_custom_call.1} parent=11 // pred_region
          _
        $region20: #{tpu_custom_call.1} parent=11 // pred_fallthru
          _
        // Predicated region
        $region21: #{tpu_custom_call.1} parent=11 // pred_check
          %p295 = pneg %p138
        $region22: #{tpu_custom_call.1} parent=11 // pred_check_branch
          %297 = sbr.rel (%p295) target = $region24
        $region23: #{tpu_custom_call.1} parent=11 // pred_region
          _
        $region24: #{tpu_custom_call.1} parent=11 // pred_fallthru
          _
        // Predicated region
        $region25: #{tpu_custom_call.1} parent=11 // pred_check
          %p298 = pneg %p159
        $region26: #{tpu_custom_call.1} parent=11 // pred_check_branch
          %300 = sbr.rel (%p298) target = $region28
        $region27: #{tpu_custom_call.1} parent=11 // pred_region
          _
        $region28: #{tpu_custom_call.1} parent=11 // pred_fallthru
          _
        // Predicated region
        $region29: #{tpu_custom_call.1} parent=11 // pred_check
          %p301 = pneg %p180
        $region30: #{tpu_custom_call.1} parent=11 // pred_check_branch
          %303 = sbr.rel (%p301) target = $region32
        $region31: #{tpu_custom_call.1} parent=11 // pred_region
          _
        $region32: #{tpu_custom_call.1} parent=11 // pred_fallthru
          _
        // Predicated region
        $region33: #{tpu_custom_call.1} parent=11 // pred_check
          %p304 = pneg %p201
        $region34: #{tpu_custom_call.1} parent=11 // pred_check_branch
          %306 = sbr.rel (%p304) target = $region36
        $region35: #{tpu_custom_call.1} parent=11 // pred_region
          _
        $region36: #{tpu_custom_call.1} parent=11 // pred_fallthru
          _
        // Predicated region
        $region37: #{tpu_custom_call.1} parent=11 // pred_check
          %p307 = pneg %p222
        $region38: #{tpu_custom_call.1} parent=11 // pred_check_branch
          %309 = sbr.rel (%p307) target = $region40
        $region39: #{tpu_custom_call.1} parent=11 // pred_region
          _
        $region40: #{tpu_custom_call.1} parent=11 // pred_fallthru
          _
      $region12: #{tpu_custom_call.1} parent=5 // pred_fallthru
        _
      %p310 = scmp.lt.s32.totalorder %s23, 2
      // Predicated region
      $region41: #{tpu_custom_call.1} parent=5 // pred_check
        %p311 = pneg %p310
      $region42: #{tpu_custom_call.1} parent=5 // pred_check_branch
        %313 = sbr.rel (%p311) target = $region44
      $region43: #{tpu_custom_call.1} parent=5 // pred_region
        // Predicated region
        $region45: #{tpu_custom_call.1} parent=43 // pred_check
          %p314 = pneg %p43
        $region46: #{tpu_custom_call.1} parent=43 // pred_check_branch
          %316 = sbr.rel (%p314) target = $region48
        $region47: #{tpu_custom_call.1} parent=43 // pred_region
          %p317 = scmp.lt.s32.totalorder %s23, 1
          %s318 = scalar_select %p317, %s23, 1
          %s319 = smul.addr %s318, 8
          %s320 = scalar_lea.vmem %s0, %s319
        $region48: #{tpu_custom_call.1} parent=43 // pred_fallthru
          _
        // Predicated region
        $region49: #{tpu_custom_call.1} parent=43 // pred_check
          %p321 = pneg %p69
        $region50: #{tpu_custom_call.1} parent=43 // pred_check_branch
          %323 = sbr.rel (%p321) target = $region52
        $region51: #{tpu_custom_call.1} parent=43 // pred_region
          %p324 = scmp.lt.s32.totalorder %s23, 1
          %s325 = scalar_select %p324, %s23, 1
          %s326 = smul.addr %s325, 8
          %s327 = scalar_lea.vmem %s1, %s326
        $region52: #{tpu_custom_call.1} parent=43 // pred_fallthru
          _
      $region44: #{tpu_custom_call.1} parent=5 // pred_fallthru
        _
      %p328 = scmp.le.s32.totalorder 1, %s23
      %p329 = scmp.lt.s32.totalorder %s23, 3
      %p330 = pnand %p328, %p329
      %p331 = pneg %p330
      // Predicated region
      $region53: #{tpu_custom_call.1} parent=5 // pred_check
        _
      $region54: #{tpu_custom_call.1} parent=5 // pred_check_branch
        %333 = sbr.rel (%p330) target = $region56
      $region55: #{tpu_custom_call.1} parent=5 // pred_region
        %s334 = ssub.s32 %s23, 1
        %p335 = scmp.lt.s32.totalorder %s28, 1
        %s336 = scalar_select %p335, %s28, 1
        %s337 = smul.addr %s336, 8
        %s338 = scalar_lea.vmem %s0, %s337
        %p339 = pneg %p49
        %p340 = pneg %p46
        %p341 = scmp.lt.s32.totalorder %s28, 1
        %s342 = scalar_select %p341, %s28, 1
        %s343 = smul.addr %s342, 8
        %s344 = scalar_lea.vmem %s1, %s343
        %p345 = pneg %p75
        %p346 = pneg %p72
        %p347 = pneg %p96
        %p348 = pneg %p93
        %p349 = pneg %p117
        %p350 = pneg %p114
        %p351 = pneg %p138
        %p352 = pneg %p135
        %p353 = pneg %p159
        %p354 = pneg %p156
        %p355 = pneg %p180
        %p356 = pneg %p177
        %p357 = pneg %p201
        %p358 = pneg %p198
        %p359 = pneg %p222
        %p360 = pneg %p219
        %p361 = pneg %p248
        %p362 = pneg %p245
        %s363 = sand.u32 %s235, 1
        %s364 = scalar_lea.sflag [#allocation3], %s363
        %s365 = sand.u32 %s235, 1
        %s366 = smul.addr %s365, 8
        %s367 = scalar_lea.vmem [#allocation2], %s366
        %p368 = pneg %p274
        %p369 = pneg %p271
        %s370 = sand.u32 %s261, 1
        %s371 = scalar_lea.sflag [#allocation5], %s370
        %s372 = sand.u32 %s261, 1
        %s373 = smul.addr %s372, 2
        %s374 = scalar_lea.vmem [#allocation4], %s373
        %p375 = scmp.lt.s32.totalorder %s28, 1
        %s376 = scalar_select %p375, %s28, 1
        %s377 = smul.addr %s376, 8
        %s378 = scalar_lea.vmem %s0, %s377
        %p379 = scmp.lt.s32.totalorder %s28, 1
        %s380 = scalar_select %p379, %s28, 1
        %s381 = smul.addr %s380, 8
        %s382 = scalar_lea.vmem %s1, %s381
        %v383 = vld [vmem:[%s378] sm:$0xff]
        %v384 = vld [vmem:[%s2] sm:$0xf]
        %v385 = vld [vmem:[%s382] sm:$0xff]
        %vm386 = vcmask 261120
        %v387 = vsel %vm386, %v383, 0.0
        %388 = vadd.xlane.f32.xlu0 %v387
        %v389 = vpop.xlane.xlu0 %388
        %v390 = vrcp.pop 32.0
        %v391 = vmul.f32 %v389, %v390
        %v392 = vsub.f32 %v383, %v391
        %v393 = vmul.f32 %v392, %v392
        %v394 = vsel %vm386, %v393, 0.0
        %395 = vadd.xlane.f32.xlu0 %v394
        %v396 = vpop.xlane.xlu0 %395
        %v397 = vmul.f32 %v396, %v390
        %v398 = vadd.f32 %v397, 1e-05
        %v399 = vrsqrt.pop %v398
        %v400 = vmul.f32 %v392, %v399
        %v401 = vlaneseq
        %v402 = vshrl.u32 %v401, 7
        %v403 = vsub.s32 0, %v402
        %v404 = vrot.slane %v384, %v403
        %v405 = vmul.f32 %v400, %v404
        %v406 = vlaneseq
        %v407 = vshrl.u32 %v406, 7
        %v408 = vsub.s32 1, %v407
        %v409 = vrot.slane %v384, %v408
        %v410 = vadd.f32 %v405, %v409
        %v411 = vld [vmem:[%s3] sm:$0xff]
        %v412 = vld [vmem:[%s3 + $0x8] sm:$0xff]
        %v413 = vld [vmem:[%s3 + $0x10] sm:$0xff]
        %v414 = vld [vmem:[%s3 + $0x18] sm:$0xff]
        %v415 = vld [vmem:[%s4] sm:$0x1]
        %v417 = vlaneseq
        %v418 = vshrl.u32 %v417, 7
        %v419 = vsub.s32 0, %v418
        %v420 = vrot.slane %v415, %v419
        %v423 = vsel %vm386, %v410, 0
        %425 = vmatprep.subr.mxu0 0.0
        %426 = vmatpush1.msra.mxu0 %v411
        %427 = vmatprep.subr.mxu0 0.0
        %428 = vmatpush1.msra.mxu0 %v412
        %429 = vmatprep.subr.mxu0 0.0
        %430 = vmatpush1.msra.mxu0 %v413
        %431 = vmatprep.subr.mxu0 0.0
        %432 = vmatpush1.msra.mxu0 %v414
        %433 = vmatprep.subr.mxu0 0.0
        %434 = vmatpush1.msra.mxu0 0.0
        %435 = vmatprep.subr.mxu0 0.0
        %436 = vmatpush1.msra.mxu0 0.0
        %437 = vmatprep.subr.mxu0 0.0
        %438 = vmatpush1.msra.mxu0 0.0
        %439 = vmatprep.subr.mxu0 0.0
        %440 = vmatpush1.msra.mxu0 0.0
        %441 = vmatprep.subr.mxu0 0.0
        %442 = vmatpush1.msra.mxu0 0.0
        %443 = vmatprep.subr.mxu0 0.0
        %444 = vmatpush1.msra.mxu0 0.0
        %445 = vmatprep.subr.mxu0 0.0
        %446 = vmatpush1.msra.mxu0 0.0
        %447 = vmatprep.subr.mxu0 0.0
        %448 = vmatpush1.msra.mxu0 0.0
        %449 = vmatprep.subr.mxu0 0.0
        %450 = vmatpush1.msra.mxu0 0.0
        %451 = vmatprep.subr.mxu0 0.0
        %452 = vmatpush1.msra.mxu0 0.0
        %453 = vmatprep.subr.mxu0 0.0
        %454 = vmatpush1.msra.mxu0 0.0
        %455 = vmatprep.subr.mxu0 0.0
        %456 = vmatpush1.msra.mxu0 0.0
        %457 = vmatprep.subr.mxu0 0.0
        %458 = vmatpush1.msra.mxu0 0.0
        %459 = vmatprep.subr.mxu0 0.0
        %460 = vmatpush1.msra.mxu0 0.0
        %461 = vmatprep.subr.mxu0 0.0
        %462 = vmatpush1.msra.mxu0 0.0
        %463 = vmatprep.subr.mxu0 0.0
        %464 = vmatpush1.msra.mxu0 0.0
        %465 = vmatprep.subr.mxu0 0.0
        %466 = vmatpush1.msra.mxu0 0.0
        %467 = vmatprep.subr.mxu0 0.0
        %468 = vmatpush1.msra.mxu0 0.0
        %469 = vmatprep.subr.mxu0 0.0
        %470 = vmatpush1.msra.mxu0 0.0
        %471 = vmatprep.subr.mxu0 0.0
        %472 = vmatpush1.msra.mxu0 0.0
        %473 = vmatprep.subr.mxu0 0.0
        %474 = vmatpush1.msra.mxu0 0.0
        %475 = vmatprep.subr.mxu0 0.0
        %476 = vmatpush1.msra.mxu0 0.0
        %477 = vmatprep.subr.mxu0 0.0
        %478 = vmatpush1.msra.mxu0 0.0
        %479 = vmatprep.subr.mxu0 0.0
        %480 = vmatpush1.msra.mxu0 0.0
        %481 = vmatprep.subr.mxu0 0.0
        %482 = vmatpush1.msra.mxu0 0.0
        %483 = vmatprep.subr.mxu0 0.0
        %484 = vmatpush1.msra.mxu0 0.0
        %485 = vmatprep.subr.mxu0 0.0
        %486 = vmatpush1.msra.mxu0 0.0
        %487 = vmatprep.subr.mxu0 0.0
        %488 = vmatpush1.msra.mxu0 0.0
        %489 = vmatprep.mubr.f32.mxu0 0.0
        %490 = vmatmul.mubr.f32.gmra.mrb[0].mxu0 %v423
        %v491 = vpop.f32.mrb[0].mxu0
        %v492 = vadd.f32 %v420, %v491
        %v493 = vpop.f32.mrb[0].mxu0
        %494 = vdwg.mxu0
        %496 = vrot.lane.b32.xlu0 %v492, 96
        %v497 = vpop.permute.xlu0 %496
        %vm498 = vcmask 64512
        %v499 = vsel %vm498, %v492, 0
        %v501 = vsel %vm498, %v497, 0
        %503 = vmatprep.subr.mxu0 0.0
        %504 = vmatpush1.xpose.msra.mxu0 %v501
        %505 = vmatprep.subr.mxu0 0.0
        %506 = vmatpush1.xpose.msra.mxu0 0.0
        %507 = vmatprep.subr.mxu0 0.0
        %508 = vmatpush1.xpose.msra.mxu0 0.0
        %509 = vmatprep.subr.mxu0 0.0
        %510 = vmatpush1.xpose.msra.mxu0 0.0
        %511 = vmatprep.subr.mxu0 0.0
        %512 = vmatpush1.xpose.msra.mxu0 0.0
        %513 = vmatprep.subr.mxu0 0.0
        %514 = vmatpush1.xpose.msra.mxu0 0.0
        %515 = vmatprep.subr.mxu0 0.0
        %516 = vmatpush1.xpose.msra.mxu0 0.0
        %517 = vmatprep.subr.mxu0 0.0
        %518 = vmatpush1.xpose.msra.mxu0 0.0
        %519 = vmatprep.subr.mxu0 0.0
        %520 = vmatpush1.xpose.msra.mxu0 0.0
        %521 = vmatprep.subr.mxu0 0.0
        %522 = vmatpush1.xpose.msra.mxu0 0.0
        %523 = vmatprep.subr.mxu0 0.0
        %524 = vmatpush1.xpose.msra.mxu0 0.0
        %525 = vmatprep.subr.mxu0 0.0
        %526 = vmatpush1.xpose.msra.mxu0 0.0
        %527 = vmatprep.subr.mxu0 0.0
        %528 = vmatpush1.xpose.msra.mxu0 0.0
        %529 = vmatprep.subr.mxu0 0.0
        %530 = vmatpush1.xpose.msra.mxu0 0.0
        %531 = vmatprep.subr.mxu0 0.0
        %532 = vmatpush1.xpose.msra.mxu0 0.0
        %533 = vmatprep.subr.mxu0 0.0
        %534 = vmatpush1.xpose.msra.mxu0 0.0
        %535 = vmatprep.subr.mxu0 0.0
        %536 = vmatpush1.xpose.msra.mxu0 0.0
        %537 = vmatprep.subr.mxu0 0.0
        %538 = vmatpush1.xpose.msra.mxu0 0.0
        %539 = vmatprep.subr.mxu0 0.0
        %540 = vmatpush1.xpose.msra.mxu0 0.0
        %541 = vmatprep.subr.mxu0 0.0
        %542 = vmatpush1.xpose.msra.mxu0 0.0
        %543 = vmatprep.subr.mxu0 0.0
        %544 = vmatpush1.xpose.msra.mxu0 0.0
        %545 = vmatprep.subr.mxu0 0.0
        %546 = vmatpush1.xpose.msra.mxu0 0.0
        %547 = vmatprep.subr.mxu0 0.0
        %548 = vmatpush1.xpose.msra.mxu0 0.0
        %549 = vmatprep.subr.mxu0 0.0
        %550 = vmatpush1.xpose.msra.mxu0 0.0
        %551 = vmatprep.subr.mxu0 0.0
        %552 = vmatpush1.xpose.msra.mxu0 0.0
        %553 = vmatprep.subr.mxu0 0.0
        %554 = vmatpush1.xpose.msra.mxu0 0.0
        %555 = vmatprep.subr.mxu0 0.0
        %556 = vmatpush1.xpose.msra.mxu0 0.0
        %557 = vmatprep.subr.mxu0 0.0
        %558 = vmatpush1.xpose.msra.mxu0 0.0
        %559 = vmatprep.subr.mxu0 0.0
        %560 = vmatpush1.xpose.msra.mxu0 0.0
        %561 = vmatprep.subr.mxu0 0.0
        %562 = vmatpush1.xpose.msra.mxu0 0.0
        %563 = vmatprep.subr.mxu0 0.0
        %564 = vmatpush1.xpose.msra.mxu0 0.0
        %565 = vmatprep.subr.mxu0 0.0
        %566 = vmatpush1.xpose.msra.mxu0 0.0
        %567 = vmatprep.mubr.f32.mxu0 0.0
        %568 = vmatmul.mubr.f32.gmra.mrb[0].mxu0 %v499
        %v569 = vpop.f32.mrb[0].mxu0
        %v570 = vadd.f32 0.0, %v569
        %v571 = vpop.f32.mrb[0].mxu0
        %572 = vdwg.mxu0
        %v573 = vmul.f32 %v570, 0.35355338
        %v574 = vadd.f32 %v573, %v385
        %v575 = vsel %vm498, %v574, -inf
        %576 = vmax.xlane.f32.xlu0 %v575
        %v577 = vpop.xlane.xlu0 %576
        %v578 = vsub.f32 %v574, %v577
        %v579 = vmul.f32 %v578, 1.442695
        %v580 = vpow.pop %v579
        %v581 = vsel %vm498, %v580, 0.0
        %582 = vadd.xlane.f32.xlu0 %v581
        %v583 = vpop.xlane.xlu0 %582
        %v584 = vrcp.pop %v583
        %v585 = vmul.f32 %v580, %v584
        %586 = vrot.lane.b32.xlu0 %v492, 64
        %v587 = vpop.permute.xlu0 %586
        %v590 = vsel %vm498, %v585, 0
        %592 = vmatprep.subr.mxu0 0.0
        %593 = vmatpush1.msra.mxu0 %v587
        %594 = vmatprep.subr.mxu0 0.0
        %595 = vmatpush1.msra.mxu0 0.0
        %596 = vmatprep.subr.mxu0 0.0
        %597 = vmatpush1.msra.mxu0 0.0
        %598 = vmatprep.subr.mxu0 0.0
        %599 = vmatpush1.msra.mxu0 0.0
        %600 = vmatprep.subr.mxu0 0.0
        %601 = vmatpush1.msra.mxu0 0.0
        %602 = vmatprep.subr.mxu0 0.0
        %603 = vmatpush1.msra.mxu0 0.0
        %604 = vmatprep.subr.mxu0 0.0
        %605 = vmatpush1.msra.mxu0 0.0
        %606 = vmatprep.subr.mxu0 0.0
        %607 = vmatpush1.msra.mxu0 0.0
        %608 = vmatprep.subr.mxu0 0.0
        %609 = vmatpush1.msra.mxu0 0.0
        %610 = vmatprep.subr.mxu0 0.0
        %611 = vmatpush1.msra.mxu0 0.0
        %612 = vmatprep.subr.mxu0 0.0
        %613 = vmatpush1.msra.mxu0 0.0
        %614 = vmatprep.subr.mxu0 0.0
        %615 = vmatpush1.msra.mxu0 0.0
        %616 = vmatprep.subr.mxu0 0.0
        %617 = vmatpush1.msra.mxu0 0.0
        %618 = vmatprep.subr.mxu0 0.0
        %619 = vmatpush1.msra.mxu0 0.0
        %620 = vmatprep.subr.mxu0 0.0
        %621 = vmatpush1.msra.mxu0 0.0
        %622 = vmatprep.subr.mxu0 0.0
        %623 = vmatpush1.msra.mxu0 0.0
        %624 = vmatprep.subr.mxu0 0.0
        %625 = vmatpush1.msra.mxu0 0.0
        %626 = vmatprep.subr.mxu0 0.0
        %627 = vmatpush1.msra.mxu0 0.0
        %628 = vmatprep.subr.mxu0 0.0
        %629 = vmatpush1.msra.mxu0 0.0
        %630 = vmatprep.subr.mxu0 0.0
        %631 = vmatpush1.msra.mxu0 0.0
        %632 = vmatprep.subr.mxu0 0.0
        %633 = vmatpush1.msra.mxu0 0.0
        %634 = vmatprep.subr.mxu0 0.0
        %635 = vmatpush1.msra.mxu0 0.0
        %636 = vmatprep.subr.mxu0 0.0
        %637 = vmatpush1.msra.mxu0 0.0
        %638 = vmatprep.subr.mxu0 0.0
        %639 = vmatpush1.msra.mxu0 0.0
        %640 = vmatprep.subr.mxu0 0.0
        %641 = vmatpush1.msra.mxu0 0.0
        %642 = vmatprep.subr.mxu0 0.0
        %643 = vmatpush1.msra.mxu0 0.0
        %644 = vmatprep.subr.mxu0 0.0
        %645 = vmatpush1.msra.mxu0 0.0
        %646 = vmatprep.subr.mxu0 0.0
        %647 = vmatpush1.msra.mxu0 0.0
        %648 = vmatprep.subr.mxu0 0.0
        %649 = vmatpush1.msra.mxu0 0.0
        %650 = vmatprep.subr.mxu0 0.0
        %651 = vmatpush1.msra.mxu0 0.0
        %652 = vmatprep.subr.mxu0 0.0
        %653 = vmatpush1.msra.mxu0 0.0
        %654 = vmatprep.subr.mxu0 0.0
        %655 = vmatpush1.msra.mxu0 0.0
        %656 = vmatprep.mubr.f32.mxu0 0.0
        %657 = vmatmul.mubr.f32.gmra.mrb[0].mxu0 %v590
        %v658 = vpop.f32.mrb[0].mxu0
        %v659 = vadd.f32 0.0, %v658
        %v660 = vpop.f32.mrb[0].mxu0
        %661 = vdwg.mxu0
        %662 = vrot.lane.b32.xlu0 %v492, 120
        %v663 = vpop.permute.xlu0 %662
        %664 = vrot.lane.b32.xlu0 %v492, 88
        %v665 = vpop.permute.xlu0 %664
        %v666 = vsel %vm498, %v663, 0
        %v668 = vsel %vm498, %v665, 0
        %670 = vmatprep.subr.mxu0 0.0
        %671 = vmatpush1.xpose.msra.mxu0 %v668
        %672 = vmatprep.subr.mxu0 0.0
        %673 = vmatpush1.xpose.msra.mxu0 0.0
        %674 = vmatprep.subr.mxu0 0.0
        %675 = vmatpush1.xpose.msra.mxu0 0.0
        %676 = vmatprep.subr.mxu0 0.0
        %677 = vmatpush1.xpose.msra.mxu0 0.0
        %678 = vmatprep.subr.mxu0 0.0
        %679 = vmatpush1.xpose.msra.mxu0 0.0
        %680 = vmatprep.subr.mxu0 0.0
        %681 = vmatpush1.xpose.msra.mxu0 0.0
        %682 = vmatprep.subr.mxu0 0.0
        %683 = vmatpush1.xpose.msra.mxu0 0.0
        %684 = vmatprep.subr.mxu0 0.0
        %685 = vmatpush1.xpose.msra.mxu0 0.0
        %686 = vmatprep.subr.mxu0 0.0
        %687 = vmatpush1.xpose.msra.mxu0 0.0
        %688 = vmatprep.subr.mxu0 0.0
        %689 = vmatpush1.xpose.msra.mxu0 0.0
        %690 = vmatprep.subr.mxu0 0.0
        %691 = vmatpush1.xpose.msra.mxu0 0.0
        %692 = vmatprep.subr.mxu0 0.0
        %693 = vmatpush1.xpose.msra.mxu0 0.0
        %694 = vmatprep.subr.mxu0 0.0
        %695 = vmatpush1.xpose.msra.mxu0 0.0
        %696 = vmatprep.subr.mxu0 0.0
        %697 = vmatpush1.xpose.msra.mxu0 0.0
        %698 = vmatprep.subr.mxu0 0.0
        %699 = vmatpush1.xpose.msra.mxu0 0.0
        %700 = vmatprep.subr.mxu0 0.0
        %701 = vmatpush1.xpose.msra.mxu0 0.0
        %702 = vmatprep.subr.mxu0 0.0
        %703 = vmatpush1.xpose.msra.mxu0 0.0
        %704 = vmatprep.subr.mxu0 0.0
        %705 = vmatpush1.xpose.msra.mxu0 0.0
        %706 = vmatprep.subr.mxu0 0.0
        %707 = vmatpush1.xpose.msra.mxu0 0.0
        %708 = vmatprep.subr.mxu0 0.0
        %709 = vmatpush1.xpose.msra.mxu0 0.0
        %710 = vmatprep.subr.mxu0 0.0
        %711 = vmatpush1.xpose.msra.mxu0 0.0
        %712 = vmatprep.subr.mxu0 0.0
        %713 = vmatpush1.xpose.msra.mxu0 0.0
        %714 = vmatprep.subr.mxu0 0.0
        %715 = vmatpush1.xpose.msra.mxu0 0.0
        %716 = vmatprep.subr.mxu0 0.0
        %717 = vmatpush1.xpose.msra.mxu0 0.0
        %718 = vmatprep.subr.mxu0 0.0
        %719 = vmatpush1.xpose.msra.mxu0 0.0
        %720 = vmatprep.subr.mxu0 0.0
        %721 = vmatpush1.xpose.msra.mxu0 0.0
        %722 = vmatprep.subr.mxu0 0.0
        %723 = vmatpush1.xpose.msra.mxu0 0.0
        %724 = vmatprep.subr.mxu0 0.0
        %725 = vmatpush1.xpose.msra.mxu0 0.0
        %726 = vmatprep.subr.mxu0 0.0
        %727 = vmatpush1.xpose.msra.mxu0 0.0
        %728 = vmatprep.subr.mxu0 0.0
        %729 = vmatpush1.xpose.msra.mxu0 0.0
        %730 = vmatprep.subr.mxu0 0.0
        %731 = vmatpush1.xpose.msra.mxu0 0.0
        %732 = vmatprep.subr.mxu0 0.0
        %733 = vmatpush1.xpose.msra.mxu0 0.0
        %734 = vmatprep.mubr.f32.mxu0 0.0
        %735 = vmatmul.mubr.f32.gmra.mrb[0].mxu0 %v666
        %v736 = vpop.f32.mrb[0].mxu0
        %v737 = vadd.f32 0.0, %v736
        %v738 = vpop.f32.mrb[0].mxu0
        %739 = vdwg.mxu0
        %v740 = vmul.f32 %v737, 0.35355338
        %v741 = vadd.f32 %v740, %v385
        %v742 = vsel %vm498, %v741, -inf
        %743 = vmax.xlane.f32.xlu0 %v742
        %v744 = vpop.xlane.xlu0 %743
        %v745 = vsub.f32 %v741, %v744
        %v746 = vmul.f32 %v745, 1.442695
        %v747 = vpow.pop %v746
        %v748 = vsel %vm498, %v747, 0.0
        %749 = vadd.xlane.f32.xlu0 %v748
        %v750 = vpop.xlane.xlu0 %749
        %v751 = vrcp.pop %v750
        %v752 = vmul.f32 %v747, %v751
        %753 = vrot.lane.b32.xlu0 %v492, 56
        %v754 = vpop.permute.xlu0 %753
        %v757 = vsel %vm498, %v752, 0
        %759 = vmatprep.subr.mxu0 0.0
        %760 = vmatpush1.msra.mxu0 %v754
        %761 = vmatprep.subr.mxu0 0.0
        %762 = vmatpush1.msra.mxu0 0.0
        %763 = vmatprep.subr.mxu0 0.0
        %764 = vmatpush1.msra.mxu0 0.0
        %765 = vmatprep.subr.mxu0 0.0
        %766 = vmatpush1.msra.mxu0 0.0
        %767 = vmatprep.subr.mxu0 0.0
        %768 = vmatpush1.msra.mxu0 0.0
        %769 = vmatprep.subr.mxu0 0.0
        %770 = vmatpush1.msra.mxu0 0.0
        %771 = vmatprep.subr.mxu0 0.0
        %772 = vmatpush1.msra.mxu0 0.0
        %773 = vmatprep.subr.mxu0 0.0
        %774 = vmatpush1.msra.mxu0 0.0
        %775 = vmatprep.subr.mxu0 0.0
        %776 = vmatpush1.msra.mxu0 0.0
        %777 = vmatprep.subr.mxu0 0.0
        %778 = vmatpush1.msra.mxu0 0.0
        %779 = vmatprep.subr.mxu0 0.0
        %780 = vmatpush1.msra.mxu0 0.0
        %781 = vmatprep.subr.mxu0 0.0
        %782 = vmatpush1.msra.mxu0 0.0
        %783 = vmatprep.subr.mxu0 0.0
        %784 = vmatpush1.msra.mxu0 0.0
        %785 = vmatprep.subr.mxu0 0.0
        %786 = vmatpush1.msra.mxu0 0.0
        %787 = vmatprep.subr.mxu0 0.0
        %788 = vmatpush1.msra.mxu0 0.0
        %789 = vmatprep.subr.mxu0 0.0
        %790 = vmatpush1.msra.mxu0 0.0
        %791 = vmatprep.subr.mxu0 0.0
        %792 = vmatpush1.msra.mxu0 0.0
        %793 = vmatprep.subr.mxu0 0.0
        %794 = vmatpush1.msra.mxu0 0.0
        %795 = vmatprep.subr.mxu0 0.0
        %796 = vmatpush1.msra.mxu0 0.0
        %797 = vmatprep.subr.mxu0 0.0
        %798 = vmatpush1.msra.mxu0 0.0
        %799 = vmatprep.subr.mxu0 0.0
        %800 = vmatpush1.msra.mxu0 0.0
        %801 = vmatprep.subr.mxu0 0.0
        %802 = vmatpush1.msra.mxu0 0.0
        %803 = vmatprep.subr.mxu0 0.0
        %804 = vmatpush1.msra.mxu0 0.0
        %805 = vmatprep.subr.mxu0 0.0
        %806 = vmatpush1.msra.mxu0 0.0
        %807 = vmatprep.subr.mxu0 0.0
        %808 = vmatpush1.msra.mxu0 0.0
        %809 = vmatprep.subr.mxu0 0.0
        %810 = vmatpush1.msra.mxu0 0.0
        %811 = vmatprep.subr.mxu0 0.0
        %812 = vmatpush1.msra.mxu0 0.0
        %813 = vmatprep.subr.mxu0 0.0
        %814 = vmatpush1.msra.mxu0 0.0
        %815 = vmatprep.subr.mxu0 0.0
        %816 = vmatpush1.msra.mxu0 0.0
        %817 = vmatprep.subr.mxu0 0.0
        %818 = vmatpush1.msra.mxu0 0.0
        %819 = vmatprep.subr.mxu0 0.0
        %820 = vmatpush1.msra.mxu0 0.0
        %821 = vmatprep.subr.mxu0 0.0
        %822 = vmatpush1.msra.mxu0 0.0
        %823 = vmatprep.mubr.f32.mxu0 0.0
        %824 = vmatmul.mubr.f32.gmra.mrb[0].mxu0 %v757
        %v825 = vpop.f32.mrb[0].mxu0
        %v826 = vadd.f32 0.0, %v825
        %v827 = vpop.f32.mrb[0].mxu0
        %828 = vdwg.mxu0
        %829 = vrot.lane.b32.xlu0 %v492, 112
        %v830 = vpop.permute.xlu0 %829
        %831 = vrot.lane.b32.xlu0 %v492, 80
        %v832 = vpop.permute.xlu0 %831
        %v833 = vsel %vm498, %v830, 0
        %v835 = vsel %vm498, %v832, 0
        %837 = vmatprep.subr.mxu0 0.0
        %838 = vmatpush1.xpose.msra.mxu0 %v835
        %839 = vmatprep.subr.mxu0 0.0
        %840 = vmatpush1.xpose.msra.mxu0 0.0
        %841 = vmatprep.subr.mxu0 0.0
        %842 = vmatpush1.xpose.msra.mxu0 0.0
        %843 = vmatprep.subr.mxu0 0.0
        %844 = vmatpush1.xpose.msra.mxu0 0.0
        %845 = vmatprep.subr.mxu0 0.0
        %846 = vmatpush1.xpose.msra.mxu0 0.0
        %847 = vmatprep.subr.mxu0 0.0
        %848 = vmatpush1.xpose.msra.mxu0 0.0
        %849 = vmatprep.subr.mxu0 0.0
        %850 = vmatpush1.xpose.msra.mxu0 0.0
        %851 = vmatprep.subr.mxu0 0.0
        %852 = vmatpush1.xpose.msra.mxu0 0.0
        %853 = vmatprep.subr.mxu0 0.0
        %854 = vmatpush1.xpose.msra.mxu0 0.0
        %855 = vmatprep.subr.mxu0 0.0
        %856 = vmatpush1.xpose.msra.mxu0 0.0
        %857 = vmatprep.subr.mxu0 0.0
        %858 = vmatpush1.xpose.msra.mxu0 0.0
        %859 = vmatprep.subr.mxu0 0.0
        %860 = vmatpush1.xpose.msra.mxu0 0.0
        %861 = vmatprep.subr.mxu0 0.0
        %862 = vmatpush1.xpose.msra.mxu0 0.0
        %863 = vmatprep.subr.mxu0 0.0
        %864 = vmatpush1.xpose.msra.mxu0 0.0
        %865 = vmatprep.subr.mxu0 0.0
        %866 = vmatpush1.xpose.msra.mxu0 0.0
        %867 = vmatprep.subr.mxu0 0.0
        %868 = vmatpush1.xpose.msra.mxu0 0.0
        %869 = vmatprep.subr.mxu0 0.0
        %870 = vmatpush1.xpose.msra.mxu0 0.0
        %871 = vmatprep.subr.mxu0 0.0
        %872 = vmatpush1.xpose.msra.mxu0 0.0
        %873 = vmatprep.subr.mxu0 0.0
        %874 = vmatpush1.xpose.msra.mxu0 0.0
        %875 = vmatprep.subr.mxu0 0.0
        %876 = vmatpush1.xpose.msra.mxu0 0.0
        %877 = vmatprep.subr.mxu0 0.0
        %878 = vmatpush1.xpose.msra.mxu0 0.0
        %879 = vmatprep.subr.mxu0 0.0
        %880 = vmatpush1.xpose.msra.mxu0 0.0
        %881 = vmatprep.subr.mxu0 0.0
        %882 = vmatpush1.xpose.msra.mxu0 0.0
        %883 = vmatprep.subr.mxu0 0.0
        %884 = vmatpush1.xpose.msra.mxu0 0.0
        %885 = vmatprep.subr.mxu0 0.0
        %886 = vmatpush1.xpose.msra.mxu0 0.0
        %887 = vmatprep.subr.mxu0 0.0
        %888 = vmatpush1.xpose.msra.mxu0 0.0
        %889 = vmatprep.subr.mxu0 0.0
        %890 = vmatpush1.xpose.msra.mxu0 0.0
        %891 = vmatprep.subr.mxu0 0.0
        %892 = vmatpush1.xpose.msra.mxu0 0.0
        %893 = vmatprep.subr.mxu0 0.0
        %894 = vmatpush1.xpose.msra.mxu0 0.0
        %895 = vmatprep.subr.mxu0 0.0
        %896 = vmatpush1.xpose.msra.mxu0 0.0
        %897 = vmatprep.subr.mxu0 0.0
        %898 = vmatpush1.xpose.msra.mxu0 0.0
        %899 = vmatprep.subr.mxu0 0.0
        %900 = vmatpush1.xpose.msra.mxu0 0.0
        %901 = vmatprep.mubr.f32.mxu0 0.0
        %902 = vmatmul.mubr.f32.gmra.mrb[0].mxu0 %v833
        %v903 = vpop.f32.mrb[0].mxu0
        %v904 = vadd.f32 0.0, %v903
        %v905 = vpop.f32.mrb[0].mxu0
        %906 = vdwg.mxu0
        %v907 = vmul.f32 %v904, 0.35355338
        %v908 = vadd.f32 %v907, %v385
        %v909 = vsel %vm498, %v908, -inf
        %910 = vmax.xlane.f32.xlu0 %v909
        %v911 = vpop.xlane.xlu0 %910
        %v912 = vsub.f32 %v908, %v911
        %v913 = vmul.f32 %v912, 1.442695
        %v914 = vpow.pop %v913
        %v915 = vsel %vm498, %v914, 0.0
        %916 = vadd.xlane.f32.xlu0 %v915
        %v917 = vpop.xlane.xlu0 %916
        %v918 = vrcp.pop %v917
        %v919 = vmul.f32 %v914, %v918
        %920 = vrot.lane.b32.xlu0 %v492, 48
        %v921 = vpop.permute.xlu0 %920
        %v924 = vsel %vm498, %v919, 0
        %926 = vmatprep.subr.mxu0 0.0
        %927 = vmatpush1.msra.mxu0 %v921
        %928 = vmatprep.subr.mxu0 0.0
        %929 = vmatpush1.msra.mxu0 0.0
        %930 = vmatprep.subr.mxu0 0.0
        %931 = vmatpush1.msra.mxu0 0.0
        %932 = vmatprep.subr.mxu0 0.0
        %933 = vmatpush1.msra.mxu0 0.0
        %934 = vmatprep.subr.mxu0 0.0
        %935 = vmatpush1.msra.mxu0 0.0
        %936 = vmatprep.subr.mxu0 0.0
        %937 = vmatpush1.msra.mxu0 0.0
        %938 = vmatprep.subr.mxu0 0.0
        %939 = vmatpush1.msra.mxu0 0.0
        %940 = vmatprep.subr.mxu0 0.0
        %941 = vmatpush1.msra.mxu0 0.0
        %942 = vmatprep.subr.mxu0 0.0
        %943 = vmatpush1.msra.mxu0 0.0
        %944 = vmatprep.subr.mxu0 0.0
        %945 = vmatpush1.msra.mxu0 0.0
        %946 = vmatprep.subr.mxu0 0.0
        %947 = vmatpush1.msra.mxu0 0.0
        %948 = vmatprep.subr.mxu0 0.0
        %949 = vmatpush1.msra.mxu0 0.0
        %950 = vmatprep.subr.mxu0 0.0
        %951 = vmatpush1.msra.mxu0 0.0
        %952 = vmatprep.subr.mxu0 0.0
        %953 = vmatpush1.msra.mxu0 0.0
        %954 = vmatprep.subr.mxu0 0.0
        %955 = vmatpush1.msra.mxu0 0.0
        %956 = vmatprep.subr.mxu0 0.0
        %957 = vmatpush1.msra.mxu0 0.0
        %958 = vmatprep.subr.mxu0 0.0
        %959 = vmatpush1.msra.mxu0 0.0
        %960 = vmatprep.subr.mxu0 0.0
        %961 = vmatpush1.msra.mxu0 0.0
        %962 = vmatprep.subr.mxu0 0.0
        %963 = vmatpush1.msra.mxu0 0.0
        %964 = vmatprep.subr.mxu0 0.0
        %965 = vmatpush1.msra.mxu0 0.0
        %966 = vmatprep.subr.mxu0 0.0
        %967 = vmatpush1.msra.mxu0 0.0
        %968 = vmatprep.subr.mxu0 0.0
        %969 = vmatpush1.msra.mxu0 0.0
        %970 = vmatprep.subr.mxu0 0.0
        %971 = vmatpush1.msra.mxu0 0.0
        %972 = vmatprep.subr.mxu0 0.0
        %973 = vmatpush1.msra.mxu0 0.0
        %974 = vmatprep.subr.mxu0 0.0
        %975 = vmatpush1.msra.mxu0 0.0
        %976 = vmatprep.subr.mxu0 0.0
        %977 = vmatpush1.msra.mxu0 0.0
        %978 = vmatprep.subr.mxu0 0.0
        %979 = vmatpush1.msra.mxu0 0.0
        %980 = vmatprep.subr.mxu0 0.0
        %981 = vmatpush1.msra.mxu0 0.0
        %982 = vmatprep.subr.mxu0 0.0
        %983 = vmatpush1.msra.mxu0 0.0
        %984 = vmatprep.subr.mxu0 0.0
        %985 = vmatpush1.msra.mxu0 0.0
        %986 = vmatprep.subr.mxu0 0.0
        %987 = vmatpush1.msra.mxu0 0.0
        %988 = vmatprep.subr.mxu0 0.0
        %989 = vmatpush1.msra.mxu0 0.0
        %990 = vmatprep.mubr.f32.mxu0 0.0
        %991 = vmatmul.mubr.f32.gmra.mrb[0].mxu0 %v924
        %v992 = vpop.f32.mrb[0].mxu0
        %v993 = vadd.f32 0.0, %v992
        %v994 = vpop.f32.mrb[0].mxu0
        %995 = vdwg.mxu0
        %996 = vrot.lane.b32.xlu0 %v492, 104
        %v997 = vpop.permute.xlu0 %996
        %998 = vrot.lane.b32.xlu0 %v492, 72
        %v999 = vpop.permute.xlu0 %998
        %v1000 = vsel %vm498, %v997, 0
        %v1002 = vsel %vm498, %v999, 0
        %1004 = vmatprep.subr.mxu0 0.0
        %1005 = vmatpush1.xpose.msra.mxu0 %v1002
        %1006 = vmatprep.subr.mxu0 0.0
        %1007 = vmatpush1.xpose.msra.mxu0 0.0
        %1008 = vmatprep.subr.mxu0 0.0
        %1009 = vmatpush1.xpose.msra.mxu0 0.0
        %1010 = vmatprep.subr.mxu0 0.0
        %1011 = vmatpush1.xpose.msra.mxu0 0.0
        %1012 = vmatprep.subr.mxu0 0.0
        %1013 = vmatpush1.xpose.msra.mxu0 0.0
        %1014 = vmatprep.subr.mxu0 0.0
        %1015 = vmatpush1.xpose.msra.mxu0 0.0
        %1016 = vmatprep.subr.mxu0 0.0
        %1017 = vmatpush1.xpose.msra.mxu0 0.0
        %1018 = vmatprep.subr.mxu0 0.0
        %1019 = vmatpush1.xpose.msra.mxu0 0.0
        %1020 = vmatprep.subr.mxu0 0.0
        %1021 = vmatpush1.xpose.msra.mxu0 0.0
        %1022 = vmatprep.subr.mxu0 0.0
        %1023 = vmatpush1.xpose.msra.mxu0 0.0
        %1024 = vmatprep.subr.mxu0 0.0
        %1025 = vmatpush1.xpose.msra.mxu0 0.0
        %1026 = vmatprep.subr.mxu0 0.0
        %1027 = vmatpush1.xpose.msra.mxu0 0.0
        %1028 = vmatprep.subr.mxu0 0.0
        %1029 = vmatpush1.xpose.msra.mxu0 0.0
        %1030 = vmatprep.subr.mxu0 0.0
        %1031 = vmatpush1.xpose.msra.mxu0 0.0
        %1032 = vmatprep.subr.mxu0 0.0
        %1033 = vmatpush1.xpose.msra.mxu0 0.0
        %1034 = vmatprep.subr.mxu0 0.0
        %1035 = vmatpush1.xpose.msra.mxu0 0.0
        %1036 = vmatprep.subr.mxu0 0.0
        %1037 = vmatpush1.xpose.msra.mxu0 0.0
        %1038 = vmatprep.subr.mxu0 0.0
        %1039 = vmatpush1.xpose.msra.mxu0 0.0
        %1040 = vmatprep.subr.mxu0 0.0
        %1041 = vmatpush1.xpose.msra.mxu0 0.0
        %1042 = vmatprep.subr.mxu0 0.0
        %1043 = vmatpush1.xpose.msra.mxu0 0.0
        %1044 = vmatprep.subr.mxu0 0.0
        %1045 = vmatpush1.xpose.msra.mxu0 0.0
        %1046 = vmatprep.subr.mxu0 0.0
        %1047 = vmatpush1.xpose.msra.mxu0 0.0
        %1048 = vmatprep.subr.mxu0 0.0
        %1049 = vmatpush1.xpose.msra.mxu0 0.0
        %1050 = vmatprep.subr.mxu0 0.0
        %1051 = vmatpush1.xpose.msra.mxu0 0.0
        %1052 = vmatprep.subr.mxu0 0.0
        %1053 = vmatpush1.xpose.msra.mxu0 0.0
        %1054 = vmatprep.subr.mxu0 0.0
        %1055 = vmatpush1.xpose.msra.mxu0 0.0
        %1056 = vmatprep.subr.mxu0 0.0
        %1057 = vmatpush1.xpose.msra.mxu0 0.0
        %1058 = vmatprep.subr.mxu0 0.0
        %1059 = vmatpush1.xpose.msra.mxu0 0.0
        %1060 = vmatprep.subr.mxu0 0.0
        %1061 = vmatpush1.xpose.msra.mxu0 0.0
        %1062 = vmatprep.subr.mxu0 0.0
        %1063 = vmatpush1.xpose.msra.mxu0 0.0
        %1064 = vmatprep.subr.mxu0 0.0
        %1065 = vmatpush1.xpose.msra.mxu0 0.0
        %1066 = vmatprep.subr.mxu0 0.0
        %1067 = vmatpush1.xpose.msra.mxu0 0.0
        %1068 = vmatprep.mubr.f32.mxu0 0.0
        %1069 = vmatmul.mubr.f32.gmra.mrb[0].mxu0 %v1000
        %v1070 = vpop.f32.mrb[0].mxu0
        %v1071 = vadd.f32 0.0, %v1070
        %v1072 = vpop.f32.mrb[0].mxu0
        %1073 = vdwg.mxu0
        %v1074 = vmul.f32 %v1071, 0.35355338
        %v1075 = vadd.f32 %v1074, %v385
        %v1076 = vsel %vm498, %v1075, -inf
        %1077 = vmax.xlane.f32.xlu0 %v1076
        %v1078 = vpop.xlane.xlu0 %1077
        %v1079 = vsub.f32 %v1075, %v1078
        %v1080 = vmul.f32 %v1079, 1.442695
        %v1081 = vpow.pop %v1080
        %v1082 = vsel %vm498, %v1081, 0.0
        %1083 = vadd.xlane.f32.xlu0 %v1082
        %v1084 = vpop.xlane.xlu0 %1083
        %v1085 = vrcp.pop %v1084
        %v1086 = vmul.f32 %v1081, %v1085
        %1087 = vrot.lane.b32.xlu0 %v492, 40
        %v1088 = vpop.permute.xlu0 %1087
        %v1091 = vsel %vm498, %v1086, 0
        %1093 = vmatprep.subr.mxu0 0.0
        %1094 = vmatpush1.msra.mxu0 %v1088
        %1095 = vmatprep.subr.mxu0 0.0
        %1096 = vmatpush1.msra.mxu0 0.0
        %1097 = vmatprep.subr.mxu0 0.0
        %1098 = vmatpush1.msra.mxu0 0.0
        %1099 = vmatprep.subr.mxu0 0.0
        %1100 = vmatpush1.msra.mxu0 0.0
        %1101 = vmatprep.subr.mxu0 0.0
        %1102 = vmatpush1.msra.mxu0 0.0
        %1103 = vmatprep.subr.mxu0 0.0
        %1104 = vmatpush1.msra.mxu0 0.0
        %1105 = vmatprep.subr.mxu0 0.0
        %1106 = vmatpush1.msra.mxu0 0.0
        %1107 = vmatprep.subr.mxu0 0.0
        %1108 = vmatpush1.msra.mxu0 0.0
        %1109 = vmatprep.subr.mxu0 0.0
        %1110 = vmatpush1.msra.mxu0 0.0
        %1111 = vmatprep.subr.mxu0 0.0
        %1112 = vmatpush1.msra.mxu0 0.0
        %1113 = vmatprep.subr.mxu0 0.0
        %1114 = vmatpush1.msra.mxu0 0.0
        %1115 = vmatprep.subr.mxu0 0.0
        %1116 = vmatpush1.msra.mxu0 0.0
        %1117 = vmatprep.subr.mxu0 0.0
        %1118 = vmatpush1.msra.mxu0 0.0
        %1119 = vmatprep.subr.mxu0 0.0
        %1120 = vmatpush1.msra.mxu0 0.0
        %1121 = vmatprep.subr.mxu0 0.0
        %1122 = vmatpush1.msra.mxu0 0.0
        %1123 = vmatprep.subr.mxu0 0.0
        %1124 = vmatpush1.msra.mxu0 0.0
        %1125 = vmatprep.subr.mxu0 0.0
        %1126 = vmatpush1.msra.mxu0 0.0
        %1127 = vmatprep.subr.mxu0 0.0
        %1128 = vmatpush1.msra.mxu0 0.0
        %1129 = vmatprep.subr.mxu0 0.0
        %1130 = vmatpush1.msra.mxu0 0.0
        %1131 = vmatprep.subr.mxu0 0.0
        %1132 = vmatpush1.msra.mxu0 0.0
        %1133 = vmatprep.subr.mxu0 0.0
        %1134 = vmatpush1.msra.mxu0 0.0
        %1135 = vmatprep.subr.mxu0 0.0
        %1136 = vmatpush1.msra.mxu0 0.0
        %1137 = vmatprep.subr.mxu0 0.0
        %1138 = vmatpush1.msra.mxu0 0.0
        %1139 = vmatprep.subr.mxu0 0.0
        %1140 = vmatpush1.msra.mxu0 0.0
        %1141 = vmatprep.subr.mxu0 0.0
        %1142 = vmatpush1.msra.mxu0 0.0
        %1143 = vmatprep.subr.mxu0 0.0
        %1144 = vmatpush1.msra.mxu0 0.0
        %1145 = vmatprep.subr.mxu0 0.0
        %1146 = vmatpush1.msra.mxu0 0.0
        %1147 = vmatprep.subr.mxu0 0.0
        %1148 = vmatpush1.msra.mxu0 0.0
        %1149 = vmatprep.subr.mxu0 0.0
        %1150 = vmatpush1.msra.mxu0 0.0
        %1151 = vmatprep.subr.mxu0 0.0
        %1152 = vmatpush1.msra.mxu0 0.0
        %1153 = vmatprep.subr.mxu0 0.0
        %1154 = vmatpush1.msra.mxu0 0.0
        %1155 = vmatprep.subr.mxu0 0.0
        %1156 = vmatpush1.msra.mxu0 0.0
        %1157 = vmatprep.mubr.f32.mxu0 0.0
        %1158 = vmatmul.mubr.f32.gmra.mrb[0].mxu0 %v1091
        %v1159 = vpop.f32.mrb[0].mxu0
        %v1160 = vadd.f32 0.0, %v1159
        %v1161 = vpop.f32.mrb[0].mxu0
        %1162 = vdwg.mxu0
        %1164 = vrot.lane.b32.xlu0 %v826, 8
        %v1165 = vpop.permute.xlu0 %1164
        %1168 = vrot.lane.b32.xlu0 %v993, 16
        %v1169 = vpop.permute.xlu0 %1168
        %1172 = vrot.lane.b32.xlu0 %v1160, 24
        %v1173 = vpop.permute.xlu0 %1172
        %v1175 = vsel %vm498, %v659, %v1165
        %vm1176 = vcmask 130048
        %v1177 = vsel %vm1176, %v1175, %v1169
        %vm1178 = vcmask 195584
        %v1179 = vsel %vm1178, %v1177, %v1173
        %v1180 = vadd.f32 %v1179, %v383
        %v1181 = vsel %vm386, %v1180, 0.0
        %1182 = vadd.xlane.f32.xlu0 %v1181
        %v1183 = vpop.xlane.xlu0 %1182
        %v1184 = vmul.f32 %v1183, %v390
        %v1185 = vsub.f32 %v1180, %v1184
        %v1186 = vmul.f32 %v1185, %v1185
        %v1187 = vsel %vm386, %v1186, 0.0
        %1188 = vadd.xlane.f32.xlu0 %v1187
        %v1189 = vpop.xlane.xlu0 %1188
        %v1190 = vmul.f32 %v1189, %v390
        %v1191 = vadd.f32 %v1190, 1e-05
        %v1192 = vrsqrt.pop %v1191
        %v1193 = vmul.f32 %v1185, %v1192
        %v1194 = vlaneseq
        %v1195 = vshrl.u32 %v1194, 7
        %v1196 = vsub.s32 2, %v1195
        %v1197 = vrot.slane %v384, %v1196
        %v1198 = vmul.f32 %v1193, %v1197
        %v1199 = vlaneseq
        %v1200 = vshrl.u32 %v1199, 7
        %v1201 = vsub.s32 3, %v1200
        %v1202 = vrot.slane %v384, %v1201
        %v1203 = vadd.f32 %v1198, %v1202
        %v1204 = vld [vmem:[%s5] sm:$0xff]
        %v1205 = vld [vmem:[%s5 + $0x8] sm:$0xff]
        %v1206 = vld [vmem:[%s5 + $0x10] sm:$0xff]
        %v1207 = vld [vmem:[%s5 + $0x18] sm:$0xff]
        %v1208 = vld [vmem:[%s6] sm:$0x1]
        %v1210 = vlaneseq
        %v1211 = vshrl.u32 %v1210, 7
        %v1212 = vsub.s32 0, %v1211
        %v1213 = vrot.slane %v1208, %v1212
        %v1216 = vsel %vm386, %v1203, 0
        %1218 = vmatprep.subr.mxu0 0.0
        %1219 = vmatpush1.msra.mxu0 %v1204
        %1220 = vmatprep.subr.mxu0 0.0
        %1221 = vmatpush1.msra.mxu0 %v1205
        %1222 = vmatprep.subr.mxu0 0.0
        %1223 = vmatpush1.msra.mxu0 %v1206
        %1224 = vmatprep.subr.mxu0 0.0
        %1225 = vmatpush1.msra.mxu0 %v1207
        %1226 = vmatprep.subr.mxu0 0.0
        %1227 = vmatpush1.msra.mxu0 0.0
        %1228 = vmatprep.subr.mxu0 0.0
        %1229 = vmatpush1.msra.mxu0 0.0
        %1230 = vmatprep.subr.mxu0 0.0
        %1231 = vmatpush1.msra.mxu0 0.0
        %1232 = vmatprep.subr.mxu0 0.0
        %1233 = vmatpush1.msra.mxu0 0.0
        %1234 = vmatprep.subr.mxu0 0.0
        %1235 = vmatpush1.msra.mxu0 0.0
        %1236 = vmatprep.subr.mxu0 0.0
        %1237 = vmatpush1.msra.mxu0 0.0
        %1238 = vmatprep.subr.mxu0 0.0
        %1239 = vmatpush1.msra.mxu0 0.0
        %1240 = vmatprep.subr.mxu0 0.0
        %1241 = vmatpush1.msra.mxu0 0.0
        %1242 = vmatprep.subr.mxu0 0.0
        %1243 = vmatpush1.msra.mxu0 0.0
        %1244 = vmatprep.subr.mxu0 0.0
        %1245 = vmatpush1.msra.mxu0 0.0
        %1246 = vmatprep.subr.mxu0 0.0
        %1247 = vmatpush1.msra.mxu0 0.0
        %1248 = vmatprep.subr.mxu0 0.0
        %1249 = vmatpush1.msra.mxu0 0.0
        %1250 = vmatprep.subr.mxu0 0.0
        %1251 = vmatpush1.msra.mxu0 0.0
        %1252 = vmatprep.subr.mxu0 0.0
        %1253 = vmatpush1.msra.mxu0 0.0
        %1254 = vmatprep.subr.mxu0 0.0
        %1255 = vmatpush1.msra.mxu0 0.0
        %1256 = vmatprep.subr.mxu0 0.0
        %1257 = vmatpush1.msra.mxu0 0.0
        %1258 = vmatprep.subr.mxu0 0.0
        %1259 = vmatpush1.msra.mxu0 0.0
        %1260 = vmatprep.subr.mxu0 0.0
        %1261 = vmatpush1.msra.mxu0 0.0
        %1262 = vmatprep.subr.mxu0 0.0
        %1263 = vmatpush1.msra.mxu0 0.0
        %1264 = vmatprep.subr.mxu0 0.0
        %1265 = vmatpush1.msra.mxu0 0.0
        %1266 = vmatprep.subr.mxu0 0.0
        %1267 = vmatpush1.msra.mxu0 0.0
        %1268 = vmatprep.subr.mxu0 0.0
        %1269 = vmatpush1.msra.mxu0 0.0
        %1270 = vmatprep.subr.mxu0 0.0
        %1271 = vmatpush1.msra.mxu0 0.0
        %1272 = vmatprep.subr.mxu0 0.0
        %1273 = vmatpush1.msra.mxu0 0.0
        %1274 = vmatprep.subr.mxu0 0.0
        %1275 = vmatpush1.msra.mxu0 0.0
        %1276 = vmatprep.subr.mxu0 0.0
        %1277 = vmatpush1.msra.mxu0 0.0
        %1278 = vmatprep.subr.mxu0 0.0
        %1279 = vmatpush1.msra.mxu0 0.0
        %1280 = vmatprep.subr.mxu0 0.0
        %1281 = vmatpush1.msra.mxu0 0.0
        %1282 = vmatprep.mubr.f32.mxu0 0.0
        %1283 = vmatmul.mubr.f32.gmra.mrb[0].mxu0 %v1216
        %v1284 = vpop.f32.mrb[0].mxu0
        %v1285 = vadd.f32 %v1213, %v1284
        %v1286 = vpop.f32.mrb[0].mxu0
        %1287 = vdwg.mxu0
        %v1288 = vmax.f32 %v1285, 0.0
        %v1289 = vld [vmem:[%s7] sm:$0xff]
        %v1290 = vld [vmem:[%s7 + $0x8] sm:$0xff]
        %v1291 = vld [vmem:[%s7 + $0x10] sm:$0xff]
        %v1292 = vld [vmem:[%s7 + $0x18] sm:$0xff]
        %v1293 = vld [vmem:[%s7 + $0x20] sm:$0xff]
        %v1294 = vld [vmem:[%s7 + $0x28] sm:$0xff]
        %v1295 = vld [vmem:[%s7 + $0x30] sm:$0xff]
        %v1296 = vld [vmem:[%s7 + $0x38] sm:$0xff]
        %v1297 = vld [vmem:[%s8] sm:$0x1]
        %v1299 = vlaneseq
        %v1300 = vshrl.u32 %v1299, 7
        %v1301 = vsub.s32 0, %v1300
        %v1302 = vrot.slane %v1297, %v1301
        %vm1304 = vcmask 523264
        %v1306 = vsel %vm1304, %v1288, 0
        %1308 = vmatprep.subr.mxu0 0.0
        %1309 = vmatpush1.msra.mxu0 %v1289
        %1310 = vmatprep.subr.mxu0 0.0
        %1311 = vmatpush1.msra.mxu0 %v1290
        %1312 = vmatprep.subr.mxu0 0.0
        %1313 = vmatpush1.msra.mxu0 %v1291
        %1314 = vmatprep.subr.mxu0 0.0
        %1315 = vmatpush1.msra.mxu0 %v1292
        %1316 = vmatprep.subr.mxu0 0.0
        %1317 = vmatpush1.msra.mxu0 %v1293
        %1318 = vmatprep.subr.mxu0 0.0
        %1319 = vmatpush1.msra.mxu0 %v1294
        %1320 = vmatprep.subr.mxu0 0.0
        %1321 = vmatpush1.msra.mxu0 %v1295
        %1322 = vmatprep.subr.mxu0 0.0
        %1323 = vmatpush1.msra.mxu0 %v1296
        %1324 = vmatprep.subr.mxu0 0.0
        %1325 = vmatpush1.msra.mxu0 0.0
        %1326 = vmatprep.subr.mxu0 0.0
        %1327 = vmatpush1.msra.mxu0 0.0
        %1328 = vmatprep.subr.mxu0 0.0
        %1329 = vmatpush1.msra.mxu0 0.0
        %1330 = vmatprep.subr.mxu0 0.0
        %1331 = vmatpush1.msra.mxu0 0.0
        %1332 = vmatprep.subr.mxu0 0.0
        %1333 = vmatpush1.msra.mxu0 0.0
        %1334 = vmatprep.subr.mxu0 0.0
        %1335 = vmatpush1.msra.mxu0 0.0
        %1336 = vmatprep.subr.mxu0 0.0
        %1337 = vmatpush1.msra.mxu0 0.0
        %1338 = vmatprep.subr.mxu0 0.0
        %1339 = vmatpush1.msra.mxu0 0.0
        %1340 = vmatprep.subr.mxu0 0.0
        %1341 = vmatpush1.msra.mxu0 0.0
        %1342 = vmatprep.subr.mxu0 0.0
        %1343 = vmatpush1.msra.mxu0 0.0
        %1344 = vmatprep.subr.mxu0 0.0
        %1345 = vmatpush1.msra.mxu0 0.0
        %1346 = vmatprep.subr.mxu0 0.0
        %1347 = vmatpush1.msra.mxu0 0.0
        %1348 = vmatprep.subr.mxu0 0.0
        %1349 = vmatpush1.msra.mxu0 0.0
        %1350 = vmatprep.subr.mxu0 0.0
        %1351 = vmatpush1.msra.mxu0 0.0
        %1352 = vmatprep.subr.mxu0 0.0
        %1353 = vmatpush1.msra.mxu0 0.0
        %1354 = vmatprep.subr.mxu0 0.0
        %1355 = vmatpush1.msra.mxu0 0.0
        %1356 = vmatprep.subr.mxu0 0.0
        %1357 = vmatpush1.msra.mxu0 0.0
        %1358 = vmatprep.subr.mxu0 0.0
        %1359 = vmatpush1.msra.mxu0 0.0
        %1360 = vmatprep.subr.mxu0 0.0
        %1361 = vmatpush1.msra.mxu0 0.0
        %1362 = vmatprep.subr.mxu0 0.0
        %1363 = vmatpush1.msra.mxu0 0.0
        %1364 = vmatprep.subr.mxu0 0.0
        %1365 = vmatpush1.msra.mxu0 0.0
        %1366 = vmatprep.subr.mxu0 0.0
        %1367 = vmatpush1.msra.mxu0 0.0
        %1368 = vmatprep.subr.mxu0 0.0
        %1369 = vmatpush1.msra.mxu0 0.0
        %1370 = vmatprep.subr.mxu0 0.0
        %1371 = vmatpush1.msra.mxu0 0.0
        %1372 = vmatprep.mubr.f32.mxu0 0.0
        %1373 = vmatmul.mubr.f32.gmra.mrb[0].mxu0 %v1306
        %v1374 = vpop.f32.mrb[0].mxu0
        %v1375 = vadd.f32 %v1302, %v1374
        %v1376 = vpop.f32.mrb[0].mxu0
        %1377 = vdwg.mxu0
        %v1378 = vadd.f32 %v1375, %v1180
        %1379 = vst.msk [vmem:[%s367] sm:$0xff] %vm386, %v1378
        %v1380 = vcombine.high %v585, 0.0
        %v1382 = vunpack.c.l.s4 1983009808
        %v1383 = vunpack.c.0.s8 %v1382
        %v1384 = vlaneseq
        %v1385 = vshrl.u32 %v1384, 7
        %v1386 = vsub.s32 %v1383, %v1385
        %v1387 = vrot.slane %v585, %v1386
        %v1389 = vunpack.c.l.s4 1983009808
        %v1390 = vunpack.c.0.s8 %v1389
        %v1391 = vlaneseq
        %v1392 = vshrl.u32 %v1391, 7
        %v1393 = vsub.s32 %v1390, %v1392
        %v1394 = vrot.slane %v1380, %v1393
        %v1395 = vcombine.high %v1387, 0.0
        %v1397 = vunpack.c.l.s4 1934713408
        %v1398 = vunpack.c.0.s8 %v1397
        %v1399 = vlaneseq
        %v1400 = vshrl.u32 %v1399, 7
        %v1401 = vsub.s32 %v1398, %v1400
        %v1402 = vrot.slane %v1387, %v1401
        %v1404 = vunpack.c.l.s4 1934713408
        %v1405 = vunpack.c.0.s8 %v1404
        %v1406 = vlaneseq
        %v1407 = vshrl.u32 %v1406, 7
        %v1408 = vsub.s32 %v1405, %v1407
        %v1409 = vrot.slane %v1395, %v1408
        %v1410 = vcombine.high %v1394, 0.0
        %v1412 = vunpack.c.l.s4 1934713408
        %v1413 = vunpack.c.0.s8 %v1412
        %v1414 = vlaneseq
        %v1415 = vshrl.u32 %v1414, 7
        %v1416 = vsub.s32 %v1413, %v1415
        %v1417 = vrot.slane %v1394, %v1416
        %v1419 = vunpack.c.l.s4 1934713408
        %v1420 = vunpack.c.0.s8 %v1419
        %v1421 = vlaneseq
        %v1422 = vshrl.u32 %v1421, 7
        %v1423 = vsub.s32 %v1420, %v1422
        %v1424 = vrot.slane %v1410, %v1423
        %v1425 = vcombine.high %v1402, 0.0
        %v1426 = vcombine.high %v1409, 0.0
        %v1427 = vcombine.high %v1417, 0.0
        %v1428 = vcombine.high %v1424, 0.0
        %1430 = vrot.lane.b32.xlu0 %v1425, 8
        %v1431 = vpop.permute.xlu0 %1430
        %1434 = vrot.lane.b32.xlu0 %v1409, 16
        %v1435 = vpop.permute.xlu0 %1434
        %1438 = vrot.lane.b32.xlu0 %v1426, 24
        %v1439 = vpop.permute.xlu0 %1438
        %1442 = vrot.lane.b32.xlu0 %v1417, 32
        %v1443 = vpop.permute.xlu0 %1442
        %1446 = vrot.lane.b32.xlu0 %v1427, 40
        %v1447 = vpop.permute.xlu0 %1446
        %1450 = vrot.lane.b32.xlu0 %v1424, 48
        %v1451 = vpop.permute.xlu0 %1450
        %1454 = vrot.lane.b32.xlu0 %v1428, 56
        %v1455 = vpop.permute.xlu0 %1454
        %v1457 = vsel %vm498, %v1402, %v1431
        %v1458 = vsel %vm1176, %v1457, %v1435
        %v1459 = vsel %vm1178, %v1458, %v1439
        %v1460 = vsel %vm386, %v1459, %v1443
        %vm1461 = vcmask 326656
        %v1462 = vsel %vm1461, %v1460, %v1447
        %vm1463 = vcmask 392192
        %v1464 = vsel %vm1463, %v1462, %v1451
        %vm1465 = vcmask 457728
        %v1466 = vsel %vm1465, %v1464, %v1455
        %v1467 = vcombine.high %v752, 0.0
        %v1469 = vunpack.c.l.s4 1983009808
        %v1470 = vunpack.c.0.s8 %v1469
        %v1471 = vlaneseq
        %v1472 = vshrl.u32 %v1471, 7
        %v1473 = vsub.s32 %v1470, %v1472
        %v1474 = vrot.slane %v752, %v1473
        %v1476 = vunpack.c.l.s4 1983009808
        %v1477 = vunpack.c.0.s8 %v1476
        %v1478 = vlaneseq
        %v1479 = vshrl.u32 %v1478, 7
        %v1480 = vsub.s32 %v1477, %v1479
        %v1481 = vrot.slane %v1467, %v1480
        %v1482 = vcombine.high %v1474, 0.0
        %v1484 = vunpack.c.l.s4 1934713408
        %v1485 = vunpack.c.0.s8 %v1484
        %v1486 = vlaneseq
        %v1487 = vshrl.u32 %v1486, 7
        %v1488 = vsub.s32 %v1485, %v1487
        %v1489 = vrot.slane %v1474, %v1488
        %v1491 = vunpack.c.l.s4 1934713408
        %v1492 = vunpack.c.0.s8 %v1491
        %v1493 = vlaneseq
        %v1494 = vshrl.u32 %v1493, 7
        %v1495 = vsub.s32 %v1492, %v1494
        %v1496 = vrot.slane %v1482, %v1495
        %v1497 = vcombine.high %v1481, 0.0
        %v1499 = vunpack.c.l.s4 1934713408
        %v1500 = vunpack.c.0.s8 %v1499
        %v1501 = vlaneseq
        %v1502 = vshrl.u32 %v1501, 7
        %v1503 = vsub.s32 %v1500, %v1502
        %v1504 = vrot.slane %v1481, %v1503
        %v1506 = vunpack.c.l.s4 1934713408
        %v1507 = vunpack.c.0.s8 %v1506
        %v1508 = vlaneseq
        %v1509 = vshrl.u32 %v1508, 7
        %v1510 = vsub.s32 %v1507, %v1509
        %v1511 = vrot.slane %v1497, %v1510
        %v1512 = vcombine.high %v1489, 0.0
        %v1513 = vcombine.high %v1496, 0.0
        %v1514 = vcombine.high %v1504, 0.0
        %v1515 = vcombine.high %v1511, 0.0
        %1517 = vrot.lane.b32.xlu0 %v1512, 8
        %v1518 = vpop.permute.xlu0 %1517
        %1521 = vrot.lane.b32.xlu0 %v1496, 16
        %v1522 = vpop.permute.xlu0 %1521
        %1525 = vrot.lane.b32.xlu0 %v1513, 24
        %v1526 = vpop.permute.xlu0 %1525
        %1529 = vrot.lane.b32.xlu0 %v1504, 32
        %v1530 = vpop.permute.xlu0 %1529
        %1533 = vrot.lane.b32.xlu0 %v1514, 40
        %v1534 = vpop.permute.xlu0 %1533
        %1537 = vrot.lane.b32.xlu0 %v1511, 48
        %v1538 = vpop.permute.xlu0 %1537
        %1541 = vrot.lane.b32.xlu0 %v1515, 56
        %v1542 = vpop.permute.xlu0 %1541
        %v1544 = vsel %vm498, %v1489, %v1518
        %v1545 = vsel %vm1176, %v1544, %v1522
        %v1546 = vsel %vm1178, %v1545, %v1526
        %v1547 = vsel %vm386, %v1546, %v1530
        %v1548 = vsel %vm1461, %v1547, %v1534
        %v1549 = vsel %vm1463, %v1548, %v1538
        %v1550 = vsel %vm1465, %v1549, %v1542
        %v1551 = vcombine.high %v919, 0.0
        %v1553 = vunpack.c.l.s4 1983009808
        %v1554 = vunpack.c.0.s8 %v1553
        %v1555 = vlaneseq
        %v1556 = vshrl.u32 %v1555, 7
        %v1557 = vsub.s32 %v1554, %v1556
        %v1558 = vrot.slane %v919, %v1557
        %v1560 = vunpack.c.l.s4 1983009808
        %v1561 = vunpack.c.0.s8 %v1560
        %v1562 = vlaneseq
        %v1563 = vshrl.u32 %v1562, 7
        %v1564 = vsub.s32 %v1561, %v1563
        %v1565 = vrot.slane %v1551, %v1564
        %v1566 = vcombine.high %v1558, 0.0
        %v1568 = vunpack.c.l.s4 1934713408
        %v1569 = vunpack.c.0.s8 %v1568
        %v1570 = vlaneseq
        %v1571 = vshrl.u32 %v1570, 7
        %v1572 = vsub.s32 %v1569, %v1571
        %v1573 = vrot.slane %v1558, %v1572
        %v1575 = vunpack.c.l.s4 1934713408
        %v1576 = vunpack.c.0.s8 %v1575
        %v1577 = vlaneseq
        %v1578 = vshrl.u32 %v1577, 7
        %v1579 = vsub.s32 %v1576, %v1578
        %v1580 = vrot.slane %v1566, %v1579
        %v1581 = vcombine.high %v1565, 0.0
        %v1583 = vunpack.c.l.s4 1934713408
        %v1584 = vunpack.c.0.s8 %v1583
        %v1585 = vlaneseq
        %v1586 = vshrl.u32 %v1585, 7
        %v1587 = vsub.s32 %v1584, %v1586
        %v1588 = vrot.slane %v1565, %v1587
        %v1590 = vunpack.c.l.s4 1934713408
        %v1591 = vunpack.c.0.s8 %v1590
        %v1592 = vlaneseq
        %v1593 = vshrl.u32 %v1592, 7
        %v1594 = vsub.s32 %v1591, %v1593
        %v1595 = vrot.slane %v1581, %v1594
        %v1596 = vcombine.high %v1573, 0.0
        %v1597 = vcombine.high %v1580, 0.0
        %v1598 = vcombine.high %v1588, 0.0
        %v1599 = vcombine.high %v1595, 0.0
        %1601 = vrot.lane.b32.xlu0 %v1596, 8
        %v1602 = vpop.permute.xlu0 %1601
        %1605 = vrot.lane.b32.xlu0 %v1580, 16
        %v1606 = vpop.permute.xlu0 %1605
        %1609 = vrot.lane.b32.xlu0 %v1597, 24
        %v1610 = vpop.permute.xlu0 %1609
        %1613 = vrot.lane.b32.xlu0 %v1588, 32
        %v1614 = vpop.permute.xlu0 %1613
        %1617 = vrot.lane.b32.xlu0 %v1598, 40
        %v1618 = vpop.permute.xlu0 %1617
        %1621 = vrot.lane.b32.xlu0 %v1595, 48
        %v1622 = vpop.permute.xlu0 %1621
        %1625 = vrot.lane.b32.xlu0 %v1599, 56
        %v1626 = vpop.permute.xlu0 %1625
        %v1628 = vsel %vm498, %v1573, %v1602
        %v1629 = vsel %vm1176, %v1628, %v1606
        %v1630 = vsel %vm1178, %v1629, %v1610
        %v1631 = vsel %vm386, %v1630, %v1614
        %v1632 = vsel %vm1461, %v1631, %v1618
        %v1633 = vsel %vm1463, %v1632, %v1622
        %v1634 = vsel %vm1465, %v1633, %v1626
        %v1635 = vcombine.high %v1086, 0.0
        %v1637 = vunpack.c.l.s4 1983009808
        %v1638 = vunpack.c.0.s8 %v1637
        %v1639 = vlaneseq
        %v1640 = vshrl.u32 %v1639, 7
        %v1641 = vsub.s32 %v1638, %v1640
        %v1642 = vrot.slane %v1086, %v1641
        %v1644 = vunpack.c.l.s4 1983009808
        %v1645 = vunpack.c.0.s8 %v1644
        %v1646 = vlaneseq
        %v1647 = vshrl.u32 %v1646, 7
        %v1648 = vsub.s32 %v1645, %v1647
        %v1649 = vrot.slane %v1635, %v1648
        %v1650 = vcombine.high %v1642, 0.0
        %v1652 = vunpack.c.l.s4 1934713408
        %v1653 = vunpack.c.0.s8 %v1652
        %v1654 = vlaneseq
        %v1655 = vshrl.u32 %v1654, 7
        %v1656 = vsub.s32 %v1653, %v1655
        %v1657 = vrot.slane %v1642, %v1656
        %v1659 = vunpack.c.l.s4 1934713408
        %v1660 = vunpack.c.0.s8 %v1659
        %v1661 = vlaneseq
        %v1662 = vshrl.u32 %v1661, 7
        %v1663 = vsub.s32 %v1660, %v1662
        %v1664 = vrot.slane %v1650, %v1663
        %v1665 = vcombine.high %v1649, 0.0
        %v1667 = vunpack.c.l.s4 1934713408
        %v1668 = vunpack.c.0.s8 %v1667
        %v1669 = vlaneseq
        %v1670 = vshrl.u32 %v1669, 7
        %v1671 = vsub.s32 %v1668, %v1670
        %v1672 = vrot.slane %v1649, %v1671
        %v1674 = vunpack.c.l.s4 1934713408
        %v1675 = vunpack.c.0.s8 %v1674
        %v1676 = vlaneseq
        %v1677 = vshrl.u32 %v1676, 7
        %v1678 = vsub.s32 %v1675, %v1677
        %v1679 = vrot.slane %v1665, %v1678
        %v1680 = vcombine.high %v1657, 0.0
        %v1681 = vcombine.high %v1664, 0.0
        %v1682 = vcombine.high %v1672, 0.0
        %v1683 = vcombine.high %v1679, 0.0
        %1685 = vrot.lane.b32.xlu0 %v1680, 8
        %v1686 = vpop.permute.xlu0 %1685
        %1689 = vrot.lane.b32.xlu0 %v1664, 16
        %v1690 = vpop.permute.xlu0 %1689
        %1693 = vrot.lane.b32.xlu0 %v1681, 24
        %v1694 = vpop.permute.xlu0 %1693
        %1697 = vrot.lane.b32.xlu0 %v1672, 32
        %v1698 = vpop.permute.xlu0 %1697
        %1701 = vrot.lane.b32.xlu0 %v1682, 40
        %v1702 = vpop.permute.xlu0 %1701
        %1705 = vrot.lane.b32.xlu0 %v1679, 48
        %v1706 = vpop.permute.xlu0 %1705
        %1709 = vrot.lane.b32.xlu0 %v1683, 56
        %v1710 = vpop.permute.xlu0 %1709
        %v1712 = vsel %vm498, %v1657, %v1686
        %v1713 = vsel %vm1176, %v1712, %v1690
        %v1714 = vsel %vm1178, %v1713, %v1694
        %v1715 = vsel %vm386, %v1714, %v1698
        %v1716 = vsel %vm1461, %v1715, %v1702
        %v1717 = vsel %vm1463, %v1716, %v1706
        %v1718 = vsel %vm1465, %v1717, %v1710
        %1720 = vrot.lane.b32.xlu0 %v1550, 64
        %v1721 = vpop.permute.xlu0 %1720
        %1724 = vrot.lane.b32.xlu0 %v1718, 64
        %v1725 = vpop.permute.xlu0 %1724
        %v1727 = vsel %vm1304, %v1466, %v1721
        %v1728 = vsel %vm1304, %v1634, %v1725
        %1730 = vst [vmem:[%s374] ss:$2 sm:$0x1] %v1727
        %s1732 = scalar_lea.vmem %s374, 1 [#allocation4]
        %1733 = vst [vmem:[%s1732] ss:$2 sm:$0x1] %v1728
        %s1734 = sand.u32 %s235, 1
        %s1735 = scalar_lea.sflag [#allocation3], %s1734
        %s1736 = sand.u32 %s235, 1
        %s1737 = smul.addr %s1736, 8
        %s1738 = scalar_lea.vmem [#allocation2], %s1737
        %s1739 = sand.u32 %s261, 1
        %s1740 = scalar_lea.sflag [#allocation5], %s1739
        %s1741 = sand.u32 %s261, 1
        %s1742 = smul.addr %s1741, 2
        %s1743 = scalar_lea.vmem [#allocation4], %s1742
        // Predicated region
        $region57: #{tpu_custom_call.1} parent=55 // pred_check
          %p1744 = pneg %p245
        $region58: #{tpu_custom_call.1} parent=55 // pred_check_branch
          %1746 = sbr.rel (%p1744) target = $region60
        $region59: #{tpu_custom_call.1} parent=55 // pred_region
          %s1748 = ssub.s32 128, 128
          %1749 = vsyncadd %s1735, %s1748
          %s1750 = smul.addr %s28, 128
          %s1751 = scalar_lea.hbm %s9, %s1750
          %s1753 = sshll.u32 %s1738, 4
          %s1754 = int_to_ptr.vmem [resolvable:$true] %s1753
          %1756 = dma.vmem_to_hbm [thread:$0]  %s1754, 128, %s1751, %s1735
        $region60: #{tpu_custom_call.1} parent=55 // pred_fallthru
          _
        // Predicated region
        $region61: #{tpu_custom_call.1} parent=55 // pred_check
          %p1757 = pneg %p271
        $region62: #{tpu_custom_call.1} parent=55 // pred_check_branch
          %1759 = sbr.rel (%p1757) target = $region64
        $region63: #{tpu_custom_call.1} parent=55 // pred_region
          %s1761 = ssub.s32 32, 32
          %1762 = vsyncadd %s1740, %s1761
          %s1763 = smul.addr %s28, 32
          %s1764 = scalar_lea.hbm %s10, %s1763
          %s1766 = sshll.u32 %s1743, 4
          %s1767 = int_to_ptr.vmem [resolvable:$true] %s1766
          %1769 = dma.vmem_to_hbm [thread:$0]  %s1767, 32, %s1764, %s1740
        $region64: #{tpu_custom_call.1} parent=55 // pred_fallthru
          _
      $region56: #{tpu_custom_call.1} parent=5 // pred_fallthru
        _
      %p1770 = scmp.le.s32.totalorder 2, %s23
      // Predicated region
      $region65: #{tpu_custom_call.1} parent=5 // pred_check
        %p1771 = pneg %p1770
      $region66: #{tpu_custom_call.1} parent=5 // pred_check_branch
        %1773 = sbr.rel (%p1771) target = $region68
      $region67: #{tpu_custom_call.1} parent=5 // pred_region
        %s1774 = ssub.s32 %s23, 2
        // Predicated region
        $region69: #{tpu_custom_call.1} parent=67 // pred_check
          %p1775 = pneg %p251
        $region70: #{tpu_custom_call.1} parent=67 // pred_check_branch
          %1777 = sbr.rel (%p1775) target = $region72
        $region71: #{tpu_custom_call.1} parent=67 // pred_region
          %s1778 = sand.u32 %s236, 1
          %s1779 = scalar_lea.sflag [#allocation3], %s1778
          %s1780 = sand.u32 %s236, 1
          %s1781 = smul.addr %s1780, 8
          %s1782 = scalar_lea.vmem [#allocation2], %s1781
          %1783 = dma.done %s1779, 128
        $region72: #{tpu_custom_call.1} parent=67 // pred_fallthru
          _
        // Predicated region
        $region73: #{tpu_custom_call.1} parent=67 // pred_check
          %p1784 = pneg %p277
        $region74: #{tpu_custom_call.1} parent=67 // pred_check_branch
          %1786 = sbr.rel (%p1784) target = $region76
        $region75: #{tpu_custom_call.1} parent=67 // pred_region
          %s1787 = sand.u32 %s262, 1
          %s1788 = scalar_lea.sflag [#allocation5], %s1787
          %s1789 = sand.u32 %s262, 1
          %s1790 = smul.addr %s1789, 2
          %s1791 = scalar_lea.vmem [#allocation4], %s1790
          %1792 = dma.done %s1788, 32
        $region76: #{tpu_custom_call.1} parent=67 // pred_fallthru
          _
      $region68: #{tpu_custom_call.1} parent=5 // pred_fallthru
        _
    $region6: #{tpu_custom_call.1} parent=1 // loop_footer
      %s27 = sadd.s32 1, %s23
    $region7: #{tpu_custom_call.1} parent=1 // loop_footer_branch
      %22 = sbr.rel target = $region3
    $region8: #{tpu_custom_call.1} parent=1 // loop_exit
      _
    %1793 = vsyncpa [#allocation3], 1
    %s1794 = scalar_lea.sflag [#allocation3], 1
    %1795 = vsyncpa %s1794, 1
    %1796 = vsyncpa [#allocation5], 1
    %s1797 = scalar_lea.sflag [#allocation5], 1
    %1798 = vsyncpa %s1797, 1

</llo_original>
